<compile_context>
chip_gen: v5e
topology: v5e:2x2
jax: 0.10.0
libtpu: 0.0.40
codegen_flags: <defaults>
</compile_context>

<pallas_src>
import numpy as np
import jax
import jax.numpy as jnp
from jax.experimental import pallas as pl
from jax.experimental.pallas import tpu as pltpu


def _vmem():
    return pl.BlockSpec(memory_space=pltpu.MemorySpace.VMEM)


# ------------------------- fused forward kernel builder -------------------------

def build_fused_forward(n_layers, netypes, t_srcs, t_tgts, n_node_types=2):
    """Returns (kernel, col_plan).  col_plan[t] = [(role, j), ...] is the static column
    layout of the concatenated projection weights for node type t."""
    col_plan = [[] for _ in range(n_node_types)]
    for j in range(netypes):
        col_plan[t_srcs[j]].append(("src", j))
        col_plan[t_tgts[j]].append(("tgt", j))
    col_index = {}
    for t in range(n_node_types):
        for slot, (role, j) in enumerate(col_plan[t]):
            col_index[(role, j)] = slot

    has_in = [any(tt == t for tt in t_tgts) for t in range(n_node_types)]

    def kernel(*refs):
        it = iter(refs)
        al_emb_ref = next(it)            # [N0, H]
        ac_ref = next(it)                # [N0, dim_ac]
        enc_w_ref = next(it)             # [dim_ac, H]
        enc_b_ref = next(it)             # [1, H]
        x1_ref = next(it)                # [N1, H]
        wcat_refs = [next(it) for _ in range(n_node_types)]   # [L, H, k_t*H]
        bsum_ref = next(it)              # [L*J, 1, H]  (b_src + b_tgt)
        emb0_ref = next(it)              # [L*J, 1, H]  (emb_self[0])
        embd_ref = next(it)              # [L*J, 1, H]  (emb_self[1] - emb_self[0])
        gsrc_refs, gdst_refs, self_refs = [], [], []
        for _ in range(netypes):
            gsrc_refs.append(next(it))   # [E_j, N_src]  one-hot
            gdst_refs.append(next(it))   # [E_j, N_tgt]  one-hot
            self_refs.append(next(it))   # [E_j, 1]      float(src == dst)
        dec_w_ref = next(it)             # [H, C]
        dec_b_ref = next(it)             # [1, C]
        logits_ref = next(it)            # [N0, C]
        probs_ref = next(it)             # [N0, C]

        H = dec_w_ref.shape[0]

        # ---------------- encoder ----------------
        x = [None] * n_node_types
        x[0] = (al_emb_ref[...]
                + jnp.dot(ac_ref[...], enc_w_ref[...],
                          preferred_element_type=jnp.float32)
                + enc_b_ref[...])
        x[1] = x1_ref[...]

        # ---------------- message-passing layers (statically unrolled) ----------------
        for i in range(n_layers):
            # one lane-denser matmul per node type (concatenated projection weights)
            proj = [jnp.dot(x[t], wcat_refs[t][i],
                            preferred_element_type=jnp.float32)
                    for t in range(n_node_types)]
            out = [jnp.zeros_like(x[t]) for t in range(n_node_types)]
            for j in range(netypes):
                ts, tt = t_srcs[j], t_tgts[j]
                ss = col_index[("src", j)]
                st = col_index[("tgt", j)]
                h_src = proj[ts][:, ss * H:(ss + 1) * H]     # [N_src, H]
                h_tgt = proj[tt][:, st * H:(st + 1) * H]     # [N_tgt, H]
                ij = i * netypes + j
                gsrc = gsrc_refs[j][...]                     # [E, N_src]
                gdst = gdst_refs[j][...]                     # [E, N_tgt]
                # per-edge messages, fully vectorized (gather == one-hot matmul)
                msg = (jnp.dot(gsrc, h_src, preferred_element_type=jnp.float32)
                       + jnp.dot(gdst, h_tgt, preferred_element_type=jnp.float32)
                       + bsum_ref[ij] + emb0_ref[ij]
                       + self_refs[j][...] * embd_ref[ij])   # [E, H]
                # relu(scatter_max with PyG fill 0) == masked max with identity 0
                agg = jnp.max(msg[:, None, :] * gdst[:, :, None], axis=0)  # [N_tgt, H]
                out[tt] = out[tt] + agg
            x = [jnp.maximum(out[t], 0.0) if has_in[t] else jnp.zeros_like(x[t])
                 for t in range(n_node_types)]

        # ---------------- decode + softmax ----------------
        logits = (jnp.dot(x[0], dec_w_ref[...],
                          preferred_element_type=jnp.float32)
                  + dec_b_ref[...])
        logits_ref[...] = logits
        m = jnp.max(logits, axis=1, keepdims=True)
        e = jnp.exp(logits - m)
        probs_ref[...] = e / jnp.sum(e, axis=1, keepdims=True)

    return kernel, col_plan


# ------------------------------ model forward ------------------------------

def mpnn_model_a_t_forward(params, xs, ess, t_srcs, t_tgts, n_layers):
    al_idx, ac, t_idx = xs
    netypes = len(ess)
    n_node_types = 2
    H = params["enc_ac_w"].shape[1]
    C = params["dec_w"].shape[1]

    kernel, col_plan = build_fused_forward(n_layers, netypes, t_srcs, t_tgts,
                                           n_node_types)

    # embedding lookups are plain gathers -> JAX glue; everything else is in-kernel
    al_emb = params["enc_al_w"][al_idx]                  # [N0, H]
    x1 = params["emb_test_w"][t_idx]                     # [N1, H]
    node_counts = [al_emb.shape[0], x1.shape[0]]

    # concatenated projection weights per node type, stacked over layers
    wcat = []
    for t in range(n_node_types):
        per_layer = []
        for i in range(n_layers):
            cols = []
            for role, j in col_plan[t]:
                p = params["mpnn"][i][j]
                cols.append(p["w_src"] if role == "src" else p["w_tgt"])
            if cols:
                per_layer.append(jnp.concatenate(cols, axis=1))       # [H, k_t*H]
            else:
                per_layer.append(jnp.zeros((H, H), jnp.float32))       # unused dummy
        wcat.append(jnp.stack(per_layer, axis=0))                       # [L, H, k_t*H]

    # per (layer, edge-type) bias / self-edge-embedding terms, flattened to [L*J, 1, H]
    bsum = jnp.stack([(params["mpnn"][i][j]["b_src"]
                       + params["mpnn"][i][j]["b_tgt"]).reshape(1, H)
                      for i in range(n_layers) for j in range(netypes)], axis=0)
    emb0 = jnp.stack([params["mpnn"][i][j]["emb_self"][0].reshape(1, H)
                      for i in range(n_layers) for j in range(netypes)], axis=0)
    embd = jnp.stack([(params["mpnn"][i][j]["emb_self"][1]
                       - params["mpnn"][i][j]["emb_self"][0]).reshape(1, H)
                      for i in range(n_layers) for j in range(netypes)], axis=0)

    # dense one-hot gather/scatter operands per edge type (shared across layers)
    edge_ops = []
    for j, es in enumerate(ess):
        src = es[0].astype(jnp.int32)
        dst = es[1].astype(jnp.int32)
        n_src = node_counts[t_srcs[j]]
        n_tgt = node_counts[t_tgts[j]]
        gsrc = (src[:, None] == jnp.arange(n_src)[None, :]).astype(jnp.float32)
        gdst = (dst[:, None] == jnp.arange(n_tgt)[None, :]).astype(jnp.float32)
        sfm = (src == dst).astype(jnp.float32)[:, None]
        edge_ops += [gsrc, gdst, sfm]

    inputs = [al_emb, ac, params["enc_ac_w"], params["enc_ac_b"].reshape(1, H), x1]
    inputs += wcat
    inputs += [bsum, emb0, embd]
    inputs += edge_ops
    inputs += [params["dec_w"], params["dec_b"].reshape(1, C)]

    N0 = node_counts[0]
    out_shape = (jax.ShapeDtypeStruct((N0, C), jnp.float32),
                 jax.ShapeDtypeStruct((N0, C), jnp.float32))
    return pl.pallas_call(
        kernel,
        out_shape=out_shape,
        in_specs=[_vmem() for _ in inputs],
        out_specs=(_vmem(), _vmem()),
    )(*inputs)


# ------------------------------ pure-JAX reference ------------------------------

def ref_forward(params, xs, ess, t_srcs, t_tgts, n_layers):
    hi = jax.lax.Precision.HIGHEST
    al_idx, ac, t_idx = xs
    x0 = (params["enc_al_w"][al_idx]
          + jnp.dot(ac, params["enc_ac_w"], precision=hi) + params["enc_ac_b"])
    x1 = params["emb_test_w"][t_idx]
    nodes = [x0, x1]
    for i in range(n_layers):
        out = [jnp.zeros_like(nodes[0]), jnp.zeros_like(nodes[1])]
        for j, (es, ts, tt) in enumerate(zip(ess, t_srcs, t_tgts)):
            p = params["mpnn"][i][j]
            src, dst = es[0], es[1]
            x_j = nodes[ts][src]
            x_i = nodes[tt][dst]
            msg = (jnp.dot(x_i, p["w_tgt"], precision=hi) + p["b_tgt"]
                   + jnp.dot(x_j, p["w_src"], precision=hi) + p["b_src"]
                   + p["emb_self"][(dst == src).astype(jnp.int32)])
            n_t = nodes[tt].shape[0]
            agg = jnp.full((n_t, msg.shape[1]), -jnp.inf, jnp.float32).at[dst].max(msg)
            agg = jnp.where(jnp.isneginf(agg), 0.0, agg)      # PyG fill for empty targets
            out[tt] = out[tt] + jnp.maximum(agg, 0.0)          # MPNN-level ReLU
        nodes = [jnp.maximum(o, 0.0) for o in out]
    logits = jnp.dot(nodes[0], params["dec_w"], precision=hi) + params["dec_b"]
    probs = jax.nn.softmax(logits, axis=1)
    return logits, probs


# ------------------------------ params / demo ------------------------------

def init_params(key, dim_h, dim_ac, n_al, netypes, n_layers, n_classes):
    keys = iter(jax.random.split(key, 8 + n_layers * netypes * 5))

    def nk():
        return next(keys)

    def xavier(k, shape):
        std = (2.0 / (shape[0] + shape[1])) ** 0.5
        return std * jax.random.normal(k, shape, dtype=jnp.float32)

    s = 1.0 / np.sqrt(dim_h)
    params = {
        "enc_al_w": xavier(nk(), (n_al, dim_h)),
        "enc_ac_w": xavier(nk(), (dim_ac, dim_h)),          # stored [in, out]
        "enc_ac_b": jax.random.normal(nk(), (dim_h,), dtype=jnp.float32),
        "emb_test_w": jax.random.normal(nk(), (1, dim_h), dtype=jnp.float32),
        "dec_w": s * jax.random.normal(nk(), (dim_h, n_classes), dtype=jnp.float32),
        "dec_b": 0.1 * jax.random.normal(nk(), (n_classes,), dtype=jnp.float32),
        "mpnn": [],
    }
    for _ in range(n_layers):
        layer = []
        for _ in range(netypes):
            layer.append({
                "w_tgt": s * jax.random.normal(nk(), (dim_h, dim_h), dtype=jnp.float32),
                "b_tgt": s * jax.random.normal(nk(), (dim_h,), dtype=jnp.float32),
                "w_src": s * jax.random.normal(nk(), (dim_h, dim_h), dtype=jnp.float32),
                "b_src": s * jax.random.normal(nk(), (dim_h,), dtype=jnp.float32),
                "emb_self": jax.random.normal(nk(), (2, dim_h), dtype=jnp.float32),
            })
        params["mpnn"].append(layer)
    return params


if __name__ == "__main__":
    # small config consistent with the module
    dim_h, dim_ac, n_al = 32, 8, 10
    netypes, n_layers, n_classes = 2, 2, 3
    t_srcs, t_tgts = [0, 1], [1, 0]          # type0 -> type1 edges, type1 -> type0 edges
    N0, N1 = 16, 8                            # lexeme/AC nodes, test nodes
    E0, E1 = 24, 24

    key = jax.random.PRNGKey(0)
    kp, k1, k2, k3, k4, k5, k6 = jax.random.split(key, 7)

    params = init_params(kp, dim_h, dim_ac, n_al, netypes, n_layers, n_classes)

    al_idx = jax.random.randint(k1, (N0,), 0, n_al, dtype=jnp.int32)
    ac_feat = jax.random.normal(k2, (N0, dim_ac), dtype=jnp.float32)
    t_idx = jnp.zeros((N1,), dtype=jnp.int32)
    xs = (al_idx, ac_feat, t_idx)

    es0 = jnp.stack([jax.random.randint(k3, (E0,), 0, N0, dtype=jnp.int32),
                     jax.random.randint(k4, (E0,), 0, N1, dtype=jnp.int32)], axis=0)
    es1 = jnp.stack([jax.random.randint(k5, (E1,), 0, N1, dtype=jnp.int32),
                     jax.random.randint(k6, (E1,), 0, N0, dtype=jnp.int32)], axis=0)
    ess = [es0, es1]

    logits, probs = mpnn_model_a_t_forward(params, xs, ess, t_srcs, t_tgts, n_layers)
    logits = jax.block_until_ready(logits)
    probs = jax.block_until_ready(probs)

    ref_logits, ref_probs = ref_forward(params, xs, ess, t_srcs, t_tgts, n_layers)

    assert logits.shape == (N0, n_classes) and probs.shape == (N0, n_classes)
    np.testing.assert_allclose(np.asarray(logits), np.asarray(ref_logits),
                               rtol=1e-2, atol=1e-2)
    np.testing.assert_allclose(np.asarray(probs), np.asarray(ref_probs),
                               rtol=1e-2, atol=1e-2)
    print("KERNEL_OK")
</pallas_src>

<mosaic_0001>
module attributes {stable_mosaic.version = 11 : i64} {
  func.func @kernel(%arg0: memref<16x32xf32, #tpu.memory_space<vmem>>, %arg1: memref<16x8xf32, #tpu.memory_space<vmem>>, %arg2: memref<8x32xf32, #tpu.memory_space<vmem>>, %arg3: memref<1x32xf32, #tpu.memory_space<vmem>>, %arg4: memref<8x32xf32, #tpu.memory_space<vmem>>, %arg5: memref<2x32x64xf32, #tpu.memory_space<vmem>>, %arg6: memref<2x32x64xf32, #tpu.memory_space<vmem>>, %arg7: memref<4x1x32xf32, #tpu.memory_space<vmem>>, %arg8: memref<4x1x32xf32, #tpu.memory_space<vmem>>, %arg9: memref<4x1x32xf32, #tpu.memory_space<vmem>>, %arg10: memref<24x16xf32, #tpu.memory_space<vmem>>, %arg11: memref<24x8xf32, #tpu.memory_space<vmem>>, %arg12: memref<24x1xf32, #tpu.memory_space<vmem>>, %arg13: memref<24x8xf32, #tpu.memory_space<vmem>>, %arg14: memref<24x16xf32, #tpu.memory_space<vmem>>, %arg15: memref<24x1xf32, #tpu.memory_space<vmem>>, %arg16: memref<32x3xf32, #tpu.memory_space<vmem>>, %arg17: memref<1x3xf32, #tpu.memory_space<vmem>>, %arg18: memref<16x3xf32, #tpu.memory_space<vmem>>, %arg19: memref<16x3xf32, #tpu.memory_space<vmem>>) attributes {dimension_semantics = [], scalar_prefetch = 0 : i64, scratch_operands = 0 : i64, tpu.core_type = #tpu.core_type<tc>} {
    %c0 = arith.constant 0 : index
    %c0_0 = arith.constant 0 : index
    %0 = vector.load %arg0[%c0, %c0_0] : memref<16x32xf32, #tpu.memory_space<vmem>>, vector<16x32xf32>
    %c0_1 = arith.constant 0 : index
    %c0_2 = arith.constant 0 : index
    %1 = vector.load %arg1[%c0_1, %c0_2] : memref<16x8xf32, #tpu.memory_space<vmem>>, vector<16x8xf32>
    %c0_3 = arith.constant 0 : index
    %c0_4 = arith.constant 0 : index
    %2 = vector.load %arg2[%c0_3, %c0_4] : memref<8x32xf32, #tpu.memory_space<vmem>>, vector<8x32xf32>
    %cst = arith.constant dense<0.000000e+00> : vector<16x32xf32>
    %3 = tpu.matmul %1, %2, %cst {dimension_numbers = #tpu.dot_dimension_numbers<[1], [0], [0], [1], [0, 0, 1, 1], [], []>} : vector<16x8xf32>, vector<8x32xf32>, vector<16x32xf32> -> vector<16x32xf32>
    %4 = arith.addf %0, %3 : vector<16x32xf32>
    %c0_5 = arith.constant 0 : index
    %c0_6 = arith.constant 0 : index
    %5 = vector.load %arg3[%c0_5, %c0_6] : memref<1x32xf32, #tpu.memory_space<vmem>>, vector<1x32xf32>
    %6 = vector.broadcast %5 : vector<1x32xf32> to vector<16x32xf32>
    %7 = arith.addf %4, %6 : vector<16x32xf32>
    %c0_7 = arith.constant 0 : index
    %c0_8 = arith.constant 0 : index
    %8 = vector.load %arg4[%c0_7, %c0_8] : memref<8x32xf32, #tpu.memory_space<vmem>>, vector<8x32xf32>
    %c0_9 = arith.constant 0 : index
    %c0_10 = arith.constant 0 : index
    %c0_11 = arith.constant 0 : index
    %9 = vector.load %arg5[%c0_9, %c0_10, %c0_11] : memref<2x32x64xf32, #tpu.memory_space<vmem>>, vector<1x32x64xf32>
    %10 = vector.shape_cast %9 : vector<1x32x64xf32> to vector<32x64xf32>
    %cst_12 = arith.constant dense<0.000000e+00> : vector<16x64xf32>
    %11 = tpu.matmul %7, %10, %cst_12 {dimension_numbers = #tpu.dot_dimension_numbers<[1], [0], [0], [1], [0, 0, 1, 1], [], []>} : vector<16x32xf32>, vector<32x64xf32>, vector<16x64xf32> -> vector<16x64xf32>
    %c0_13 = arith.constant 0 : index
    %c0_14 = arith.constant 0 : index
    %c0_15 = arith.constant 0 : index
    %12 = vector.load %arg6[%c0_13, %c0_14, %c0_15] : memref<2x32x64xf32, #tpu.memory_space<vmem>>, vector<1x32x64xf32>
    %13 = vector.shape_cast %12 : vector<1x32x64xf32> to vector<32x64xf32>
    %cst_16 = arith.constant dense<0.000000e+00> : vector<8x64xf32>
    %14 = tpu.matmul %8, %13, %cst_16 {dimension_numbers = #tpu.dot_dimension_numbers<[1], [0], [0], [1], [0, 0, 1, 1], [], []>} : vector<8x32xf32>, vector<32x64xf32>, vector<8x64xf32> -> vector<8x64xf32>
    %cst_17 = arith.constant 0.000000e+00 : f32
    %15 = vector.broadcast %cst_17 : f32 to vector<16x32xf32>
    %cst_18 = arith.constant 0.000000e+00 : f32
    %16 = vector.broadcast %cst_18 : f32 to vector<8x32xf32>
    %17 = vector.extract_strided_slice %11 {offsets = [0, 0], sizes = [16, 32], strides = [1, 1]} : vector<16x64xf32> to vector<16x32xf32>
    %18 = vector.extract_strided_slice %14 {offsets = [0, 0], sizes = [8, 32], strides = [1, 1]} : vector<8x64xf32> to vector<8x32xf32>
    %c0_19 = arith.constant 0 : index
    %c0_20 = arith.constant 0 : index
    %19 = vector.load %arg10[%c0_19, %c0_20] : memref<24x16xf32, #tpu.memory_space<vmem>>, vector<24x16xf32>
    %c0_21 = arith.constant 0 : index
    %c0_22 = arith.constant 0 : index
    %20 = vector.load %arg11[%c0_21, %c0_22] : memref<24x8xf32, #tpu.memory_space<vmem>>, vector<24x8xf32>
    %cst_23 = arith.constant dense<0.000000e+00> : vector<24x32xf32>
    %21 = tpu.matmul %19, %17, %cst_23 {dimension_numbers = #tpu.dot_dimension_numbers<[1], [0], [0], [1], [0, 0, 1, 1], [], []>} : vector<24x16xf32>, vector<16x32xf32>, vector<24x32xf32> -> vector<24x32xf32>
    %cst_24 = arith.constant dense<0.000000e+00> : vector<24x32xf32>
    %22 = tpu.matmul %20, %18, %cst_24 {dimension_numbers = #tpu.dot_dimension_numbers<[1], [0], [0], [1], [0, 0, 1, 1], [], []>} : vector<24x8xf32>, vector<8x32xf32>, vector<24x32xf32> -> vector<24x32xf32>
    %23 = arith.addf %21, %22 : vector<24x32xf32>
    %c0_25 = arith.constant 0 : index
    %c0_26 = arith.constant 0 : index
    %c0_27 = arith.constant 0 : index
    %24 = vector.load %arg7[%c0_25, %c0_26, %c0_27] : memref<4x1x32xf32, #tpu.memory_space<vmem>>, vector<1x1x32xf32>
    %25 = vector.shape_cast %24 : vector<1x1x32xf32> to vector<1x32xf32>
    %26 = vector.broadcast %25 : vector<1x32xf32> to vector<24x32xf32>
    %27 = arith.addf %23, %26 : vector<24x32xf32>
    %c0_28 = arith.constant 0 : index
    %c0_29 = arith.constant 0 : index
    %c0_30 = arith.constant 0 : index
    %28 = vector.load %arg8[%c0_28, %c0_29, %c0_30] : memref<4x1x32xf32, #tpu.memory_space<vmem>>, vector<1x1x32xf32>
    %29 = vector.shape_cast %28 : vector<1x1x32xf32> to vector<1x32xf32>
    %30 = vector.broadcast %29 : vector<1x32xf32> to vector<24x32xf32>
    %31 = arith.addf %27, %30 : vector<24x32xf32>
    %c0_31 = arith.constant 0 : index
    %c0_32 = arith.constant 0 : index
    %32 = vector.load %arg12[%c0_31, %c0_32] : memref<24x1xf32, #tpu.memory_space<vmem>>, vector<24x1xf32>
    %c0_33 = arith.constant 0 : index
    %c0_34 = arith.constant 0 : index
    %c0_35 = arith.constant 0 : index
    %33 = vector.load %arg9[%c0_33, %c0_34, %c0_35] : memref<4x1x32xf32, #tpu.memory_space<vmem>>, vector<1x1x32xf32>
    %34 = vector.shape_cast %33 : vector<1x1x32xf32> to vector<1x32xf32>
    %35 = vector.broadcast %32 : vector<24x1xf32> to vector<24x32xf32>
    %36 = vector.broadcast %34 : vector<1x32xf32> to vector<24x32xf32>
    %37 = arith.mulf %35, %36 : vector<24x32xf32>
    %38 = arith.addf %31, %37 : vector<24x32xf32>
    %39 = vector.shape_cast %38 : vector<24x32xf32> to vector<24x1x32xf32>
    %40 = vector.shape_cast %20 : vector<24x8xf32> to vector<24x8x1xf32>
    %41 = vector.broadcast %39 : vector<24x1x32xf32> to vector<24x8x32xf32>
    %42 = vector.broadcast %40 : vector<24x8x1xf32> to vector<24x8x32xf32>
    %43 = arith.mulf %41, %42 : vector<24x8x32xf32>
    %cst_36 = arith.constant dense<0xFF800000> : vector<8x32xf32>
    %44 = vector.multi_reduction <maximumf>, %43, %cst_36 [0] : vector<24x8x32xf32> to vector<8x32xf32>
    %45 = arith.addf %16, %44 : vector<8x32xf32>
    %46 = vector.extract_strided_slice %14 {offsets = [0, 32], sizes = [8, 32], strides = [1, 1]} : vector<8x64xf32> to vector<8x32xf32>
    %47 = vector.extract_strided_slice %11 {offsets = [0, 32], sizes = [16, 32], strides = [1, 1]} : vector<16x64xf32> to vector<16x32xf32>
    %c0_37 = arith.constant 0 : index
    %c0_38 = arith.constant 0 : index
    %48 = vector.load %arg13[%c0_37, %c0_38] : memref<24x8xf32, #tpu.memory_space<vmem>>, vector<24x8xf32>
    %c0_39 = arith.constant 0 : index
    %c0_40 = arith.constant 0 : index
    %49 = vector.load %arg14[%c0_39, %c0_40] : memref<24x16xf32, #tpu.memory_space<vmem>>, vector<24x16xf32>
    %cst_41 = arith.constant dense<0.000000e+00> : vector<24x32xf32>
    %50 = tpu.matmul %48, %46, %cst_41 {dimension_numbers = #tpu.dot_dimension_numbers<[1], [0], [0], [1], [0, 0, 1, 1], [], []>} : vector<24x8xf32>, vector<8x32xf32>, vector<24x32xf32> -> vector<24x32xf32>
    %cst_42 = arith.constant dense<0.000000e+00> : vector<24x32xf32>
    %51 = tpu.matmul %49, %47, %cst_42 {dimension_numbers = #tpu.dot_dimension_numbers<[1], [0], [0], [1], [0, 0, 1, 1], [], []>} : vector<24x16xf32>, vector<16x32xf32>, vector<24x32xf32> -> vector<24x32xf32>
    %52 = arith.addf %50, %51 : vector<24x32xf32>
    %c1 = arith.constant 1 : index
    %c0_43 = arith.constant 0 : index
    %c0_44 = arith.constant 0 : index
    %53 = vector.load %arg7[%c1, %c0_43, %c0_44] : memref<4x1x32xf32, #tpu.memory_space<vmem>>, vector<1x1x32xf32>
    %54 = vector.shape_cast %53 : vector<1x1x32xf32> to vector<1x32xf32>
    %55 = vector.broadcast %54 : vector<1x32xf32> to vector<24x32xf32>
    %56 = arith.addf %52, %55 : vector<24x32xf32>
    %c1_45 = arith.constant 1 : index
    %c0_46 = arith.constant 0 : index
    %c0_47 = arith.constant 0 : index
    %57 = vector.load %arg8[%c1_45, %c0_46, %c0_47] : memref<4x1x32xf32, #tpu.memory_space<vmem>>, vector<1x1x32xf32>
    %58 = vector.shape_cast %57 : vector<1x1x32xf32> to vector<1x32xf32>
    %59 = vector.broadcast %58 : vector<1x32xf32> to vector<24x32xf32>
    %60 = arith.addf %56, %59 : vector<24x32xf32>
    %c0_48 = arith.constant 0 : index
    %c0_49 = arith.constant 0 : index
    %61 = vector.load %arg15[%c0_48, %c0_49] : memref<24x1xf32, #tpu.memory_space<vmem>>, vector<24x1xf32>
    %c1_50 = arith.constant 1 : index
    %c0_51 = arith.constant 0 : index
    %c0_52 = arith.constant 0 : index
    %62 = vector.load %arg9[%c1_50, %c0_51, %c0_52] : memref<4x1x32xf32, #tpu.memory_space<vmem>>, vector<1x1x32xf32>
    %63 = vector.shape_cast %62 : vector<1x1x32xf32> to vector<1x32xf32>
    %64 = vector.broadcast %61 : vector<24x1xf32> to vector<24x32xf32>
    %65 = vector.broadcast %63 : vector<1x32xf32> to vector<24x32xf32>
    %66 = arith.mulf %64, %65 : vector<24x32xf32>
    %67 = arith.addf %60, %66 : vector<24x32xf32>
    %68 = vector.shape_cast %67 : vector<24x32xf32> to vector<24x1x32xf32>
    %69 = vector.shape_cast %49 : vector<24x16xf32> to vector<24x16x1xf32>
    %70 = vector.broadcast %68 : vector<24x1x32xf32> to vector<24x16x32xf32>
    %71 = vector.broadcast %69 : vector<24x16x1xf32> to vector<24x16x32xf32>
    %72 = arith.mulf %70, %71 : vector<24x16x32xf32>
    %cst_53 = arith.constant dense<0xFF800000> : vector<16x32xf32>
    %73 = vector.multi_reduction <maximumf>, %72, %cst_53 [0] : vector<24x16x32xf32> to vector<16x32xf32>
    %74 = arith.addf %15, %73 : vector<16x32xf32>
    %cst_54 = arith.constant 0.000000e+00 : f32
    %75 = vector.broadcast %cst_54 : f32 to vector<16x32xf32>
    %76 = arith.maximumf %74, %75 : vector<16x32xf32>
    %cst_55 = arith.constant 0.000000e+00 : f32
    %77 = vector.broadcast %cst_55 : f32 to vector<8x32xf32>
    %78 = arith.maximumf %45, %77 : vector<8x32xf32>
    %c1_56 = arith.constant 1 : index
    %c0_57 = arith.constant 0 : index
    %c0_58 = arith.constant 0 : index
    %79 = vector.load %arg5[%c1_56, %c0_57, %c0_58] : memref<2x32x64xf32, #tpu.memory_space<vmem>>, vector<1x32x64xf32>
    %80 = vector.shape_cast %79 : vector<1x32x64xf32> to vector<32x64xf32>
    %cst_59 = arith.constant dense<0.000000e+00> : vector<16x64xf32>
    %81 = tpu.matmul %76, %80, %cst_59 {dimension_numbers = #tpu.dot_dimension_numbers<[1], [0], [0], [1], [0, 0, 1, 1], [], []>} : vector<16x32xf32>, vector<32x64xf32>, vector<16x64xf32> -> vector<16x64xf32>
    %c1_60 = arith.constant 1 : index
    %c0_61 = arith.constant 0 : index
    %c0_62 = arith.constant 0 : index
    %82 = vector.load %arg6[%c1_60, %c0_61, %c0_62] : memref<2x32x64xf32, #tpu.memory_space<vmem>>, vector<1x32x64xf32>
    %83 = vector.shape_cast %82 : vector<1x32x64xf32> to vector<32x64xf32>
    %cst_63 = arith.constant dense<0.000000e+00> : vector<8x64xf32>
    %84 = tpu.matmul %78, %83, %cst_63 {dimension_numbers = #tpu.dot_dimension_numbers<[1], [0], [0], [1], [0, 0, 1, 1], [], []>} : vector<8x32xf32>, vector<32x64xf32>, vector<8x64xf32> -> vector<8x64xf32>
    %cst_64 = arith.constant 0.000000e+00 : f32
    %85 = vector.broadcast %cst_64 : f32 to vector<16x32xf32>
    %86 = vector.extract_strided_slice %84 {offsets = [0, 32], sizes = [8, 32], strides = [1, 1]} : vector<8x64xf32> to vector<8x32xf32>
    %87 = vector.extract_strided_slice %81 {offsets = [0, 32], sizes = [16, 32], strides = [1, 1]} : vector<16x64xf32> to vector<16x32xf32>
    %c0_65 = arith.constant 0 : index
    %c0_66 = arith.constant 0 : index
    %88 = vector.load %arg13[%c0_65, %c0_66] : memref<24x8xf32, #tpu.memory_space<vmem>>, vector<24x8xf32>
    %c0_67 = arith.constant 0 : index
    %c0_68 = arith.constant 0 : index
    %89 = vector.load %arg14[%c0_67, %c0_68] : memref<24x16xf32, #tpu.memory_space<vmem>>, vector<24x16xf32>
    %cst_69 = arith.constant dense<0.000000e+00> : vector<24x32xf32>
    %90 = tpu.matmul %88, %86, %cst_69 {dimension_numbers = #tpu.dot_dimension_numbers<[1], [0], [0], [1], [0, 0, 1, 1], [], []>} : vector<24x8xf32>, vector<8x32xf32>, vector<24x32xf32> -> vector<24x32xf32>
    %cst_70 = arith.constant dense<0.000000e+00> : vector<24x32xf32>
    %91 = tpu.matmul %89, %87, %cst_70 {dimension_numbers = #tpu.dot_dimension_numbers<[1], [0], [0], [1], [0, 0, 1, 1], [], []>} : vector<24x16xf32>, vector<16x32xf32>, vector<24x32xf32> -> vector<24x32xf32>
    %92 = arith.addf %90, %91 : vector<24x32xf32>
    %c3 = arith.constant 3 : index
    %c0_71 = arith.constant 0 : index
    %c0_72 = arith.constant 0 : index
    %93 = vector.load %arg7[%c3, %c0_71, %c0_72] : memref<4x1x32xf32, #tpu.memory_space<vmem>>, vector<1x1x32xf32>
    %94 = vector.shape_cast %93 : vector<1x1x32xf32> to vector<1x32xf32>
    %95 = vector.broadcast %94 : vector<1x32xf32> to vector<24x32xf32>
    %96 = arith.addf %92, %95 : vector<24x32xf32>
    %c3_73 = arith.constant 3 : index
    %c0_74 = arith.constant 0 : index
    %c0_75 = arith.constant 0 : index
    %97 = vector.load %arg8[%c3_73, %c0_74, %c0_75] : memref<4x1x32xf32, #tpu.memory_space<vmem>>, vector<1x1x32xf32>
    %98 = vector.shape_cast %97 : vector<1x1x32xf32> to vector<1x32xf32>
    %99 = vector.broadcast %98 : vector<1x32xf32> to vector<24x32xf32>
    %100 = arith.addf %96, %99 : vector<24x32xf32>
    %c0_76 = arith.constant 0 : index
    %c0_77 = arith.constant 0 : index
    %101 = vector.load %arg15[%c0_76, %c0_77] : memref<24x1xf32, #tpu.memory_space<vmem>>, vector<24x1xf32>
    %c3_78 = arith.constant 3 : index
    %c0_79 = arith.constant 0 : index
    %c0_80 = arith.constant 0 : index
    %102 = vector.load %arg9[%c3_78, %c0_79, %c0_80] : memref<4x1x32xf32, #tpu.memory_space<vmem>>, vector<1x1x32xf32>
    %103 = vector.shape_cast %102 : vector<1x1x32xf32> to vector<1x32xf32>
    %104 = vector.broadcast %101 : vector<24x1xf32> to vector<24x32xf32>
    %105 = vector.broadcast %103 : vector<1x32xf32> to vector<24x32xf32>
    %106 = arith.mulf %104, %105 : vector<24x32xf32>
    %107 = arith.addf %100, %106 : vector<24x32xf32>
    %108 = vector.shape_cast %107 : vector<24x32xf32> to vector<24x1x32xf32>
    %109 = vector.shape_cast %89 : vector<24x16xf32> to vector<24x16x1xf32>
    %110 = vector.broadcast %108 : vector<24x1x32xf32> to vector<24x16x32xf32>
    %111 = vector.broadcast %109 : vector<24x16x1xf32> to vector<24x16x32xf32>
    %112 = arith.mulf %110, %111 : vector<24x16x32xf32>
    %cst_81 = arith.constant dense<0xFF800000> : vector<16x32xf32>
    %113 = vector.multi_reduction <maximumf>, %112, %cst_81 [0] : vector<24x16x32xf32> to vector<16x32xf32>
    %114 = arith.addf %85, %113 : vector<16x32xf32>
    %cst_82 = arith.constant 0.000000e+00 : f32
    %115 = vector.broadcast %cst_82 : f32 to vector<16x32xf32>
    %116 = arith.maximumf %114, %115 : vector<16x32xf32>
    %c0_83 = arith.constant 0 : index
    %c0_84 = arith.constant 0 : index
    %117 = vector.load %arg16[%c0_83, %c0_84] : memref<32x3xf32, #tpu.memory_space<vmem>>, vector<32x3xf32>
    %cst_85 = arith.constant dense<0.000000e+00> : vector<16x3xf32>
    %118 = tpu.matmul %116, %117, %cst_85 {dimension_numbers = #tpu.dot_dimension_numbers<[1], [0], [0], [1], [0, 0, 1, 1], [], []>} : vector<16x32xf32>, vector<32x3xf32>, vector<16x3xf32> -> vector<16x3xf32>
    %c0_86 = arith.constant 0 : index
    %c0_87 = arith.constant 0 : index
    %119 = vector.load %arg17[%c0_86, %c0_87] : memref<1x3xf32, #tpu.memory_space<vmem>>, vector<1x3xf32>
    %120 = vector.broadcast %119 : vector<1x3xf32> to vector<16x3xf32>
    %121 = arith.addf %118, %120 : vector<16x3xf32>
    %c0_88 = arith.constant 0 : index
    %c0_89 = arith.constant 0 : index
    %122 = vector.load %arg18[%c0_88, %c0_89] : memref<16x3xf32, #tpu.memory_space<vmem>>, vector<16x3xf32>
    tpu.vector_store %arg18[%c0_88, %c0_89], %121 {strides = array<i32>} : memref<16x3xf32, #tpu.memory_space<vmem>>, vector<16x3xf32>,
    %cst_90 = arith.constant dense<0xFF800000> : vector<16xf32>
    %123 = vector.multi_reduction <maximumf>, %121, %cst_90 [1] : vector<16x3xf32> to vector<16xf32>
    %124 = vector.shape_cast %123 : vector<16xf32> to vector<16x1xf32>
    %125 = vector.broadcast %124 : vector<16x1xf32> to vector<16x3xf32>
    %126 = arith.subf %121, %125 : vector<16x3xf32>
    %127 = math.exp %126 : vector<16x3xf32>
    %cst_91 = arith.constant dense<0.000000e+00> : vector<16xf32>
    %128 = vector.multi_reduction <add>, %127, %cst_91 [1] : vector<16x3xf32> to vector<16xf32>
    %129 = vector.shape_cast %128 : vector<16xf32> to vector<16x1xf32>
    %130 = vector.broadcast %129 : vector<16x1xf32> to vector<16x3xf32>
    %131 = arith.divf %127, %130 : vector<16x3xf32>
    %c0_92 = arith.constant 0 : index
    %c0_93 = arith.constant 0 : index
    %132 = vector.load %arg19[%c0_92, %c0_93] : memref<16x3xf32, #tpu.memory_space<vmem>>, vector<16x3xf32>
    tpu.vector_store %arg19[%c0_92, %c0_93], %131 {strides = array<i32>} : memref<16x3xf32, #tpu.memory_space<vmem>>, vector<16x3xf32>,
    return
  }
}

</mosaic_0001>

<llo_original>
// kernel: tpu_custom_call.1
$region0: #{tpu_custom_call.1}
  #allocation0 [shape = 'u32[]', space=smem, size = 0x4, offset = 0x4, fixed_abs, tag = 'smem constant byte address 0x4 - core index']
  #allocation1 [shape = 'u32[72,128]{1,0:T(1,128)}', space=vmem, size = 0x9000, scoped, tag = 'internal scratch']
  %s0 = inlined_call_operand.vmem [shape: f32[16,32], index: 0, kind: input, shape index: {}]
  %s1 = inlined_call_operand.vmem [shape: f32[16,8], index: 1, kind: input, shape index: {}]
  %s2 = inlined_call_operand.vmem [shape: f32[8,32], index: 2, kind: input, shape index: {}]
  %s3 = inlined_call_operand.vmem [shape: f32[1,32], index: 3, kind: input, shape index: {}]
  %s4 = inlined_call_operand.vmem [shape: f32[8,32], index: 4, kind: input, shape index: {}]
  %s5 = inlined_call_operand.hbm [shape: f32[2,32,64], index: 5, kind: input, shape index: {}]
  %s6 = inlined_call_operand.hbm [shape: f32[2,32,64], index: 6, kind: input, shape index: {}]
  %s7 = inlined_call_operand.vmem [shape: f32[4,1,32], index: 7, kind: input, shape index: {}]
  %s8 = inlined_call_operand.vmem [shape: f32[4,1,32], index: 8, kind: input, shape index: {}]
  %s9 = inlined_call_operand.vmem [shape: f32[4,1,32], index: 9, kind: input, shape index: {}]
  %s10 = inlined_call_operand.vmem [shape: f32[24,16], index: 10, kind: input, shape index: {}]
  %s11 = inlined_call_operand.vmem [shape: f32[24,8], index: 11, kind: input, shape index: {}]
  %s12 = inlined_call_operand.vmem [shape: f32[24,1], index: 12, kind: input, shape index: {}]
  %s13 = inlined_call_operand.vmem [shape: f32[24,8], index: 13, kind: input, shape index: {}]
  %s14 = inlined_call_operand.vmem [shape: f32[24,16], index: 14, kind: input, shape index: {}]
  %s15 = inlined_call_operand.vmem [shape: f32[24,1], index: 15, kind: input, shape index: {}]
  %s16 = inlined_call_operand.vmem [shape: f32[32,3], index: 16, kind: input, shape index: {}]
  %s17 = inlined_call_operand.vmem [shape: f32[1,3], index: 17, kind: input, shape index: {}]
  %s18 = inlined_call_operand.vmem [shape: f32[16,3], index: 18, kind: output, shape index: {0}]
  %s19 = inlined_call_operand.vmem [shape: f32[16,3], index: 19, kind: output, shape index: {1}]
  %20 = xla_tuple %s18, %s19
  %s21 = sld [smem:[#allocation0]]
  $region98: #{tpu_custom_call.1} parent=0
    _
  %s23 = ssub.s32 1, %s21
  %s24 = scalar_select 0, %s23, %s21
  $region1: #{tpu_custom_call.1} parent=0
    #allocation2 [shape = 'u8[32768]{0}', space=vmem, size = 0x8000, scoped, tag = 'input window, operand 5, single buffered']
    #allocation3 [shape = 's32[1]{0}', space=sflag, size = 0x4, scoped, tag = 'scoped memory for tpu_custom_call.1']
    #allocation4 [shape = 'u8[32768]{0}', space=vmem, size = 0x8000, scoped, tag = 'input window, operand 6, single buffered']
    #allocation5 [shape = 's32[1]{0}', space=sflag, size = 0x4, scoped, tag = 'scoped memory for tpu_custom_call.1']
    %25 = vsyncpa [#allocation3], 0
    %26 = vsyncpa [#allocation5], 0
    // Predicated region
    $region2: #{tpu_custom_call.1} parent=1 // pred_check
      _
    $region3: #{tpu_custom_call.1} parent=1 // pred_check_branch
      %28 = sbr.rel (0) target = $region5
    $region4: #{tpu_custom_call.1} parent=1 // pred_region
      _
    $region5: #{tpu_custom_call.1} parent=1 // pred_fallthru
      _
    // Predicated region
    $region6: #{tpu_custom_call.1} parent=1 // pred_check
      _
    $region7: #{tpu_custom_call.1} parent=1 // pred_check_branch
      %30 = sbr.rel (0) target = $region9
    $region8: #{tpu_custom_call.1} parent=1 // pred_region
      _
    $region9: #{tpu_custom_call.1} parent=1 // pred_fallthru
      _
    // Predicated region
    $region10: #{tpu_custom_call.1} parent=1 // pred_check
      _
    $region11: #{tpu_custom_call.1} parent=1 // pred_check_branch
      %32 = sbr.rel (0) target = $region13
    $region12: #{tpu_custom_call.1} parent=1 // pred_region
      _
    $region13: #{tpu_custom_call.1} parent=1 // pred_fallthru
      _
    // Predicated region
    $region14: #{tpu_custom_call.1} parent=1 // pred_check
      _
    $region15: #{tpu_custom_call.1} parent=1 // pred_check_branch
      %34 = sbr.rel (0) target = $region17
    $region16: #{tpu_custom_call.1} parent=1 // pred_region
      _
    $region17: #{tpu_custom_call.1} parent=1 // pred_fallthru
      _
    // Predicated region
    $region18: #{tpu_custom_call.1} parent=1 // pred_check
      _
    $region19: #{tpu_custom_call.1} parent=1 // pred_check_branch
      %36 = sbr.rel (0) target = $region21
    $region20: #{tpu_custom_call.1} parent=1 // pred_region
      _
    $region21: #{tpu_custom_call.1} parent=1 // pred_fallthru
      _
    // Predicated region
    $region22: #{tpu_custom_call.1} parent=1 // pred_check
      _
    $region23: #{tpu_custom_call.1} parent=1 // pred_check_branch
      %38 = sbr.rel (0) target = $region25
    $region24: #{tpu_custom_call.1} parent=1 // pred_region
      %40 = vsyncadd [#allocation3], 0
      %s41 = sshll.u32 %s5, 4
      %s42 = int_to_ptr.hbm [resolvable:$true] %s41
      %s43 = sshll.u32 [#allocation2], 4
      %s44 = int_to_ptr.vmem [resolvable:$true] %s43
      %49 = dma.hbm_to_vmem [thread:$0]  %s42, 1024, %s44, [#allocation3], 128, 128, 8
    $region25: #{tpu_custom_call.1} parent=1 // pred_fallthru
      _
    // Predicated region
    $region26: #{tpu_custom_call.1} parent=1 // pred_check
      _
    $region27: #{tpu_custom_call.1} parent=1 // pred_check_branch
      %51 = sbr.rel (0) target = $region29
    $region28: #{tpu_custom_call.1} parent=1 // pred_region
      %53 = vsyncadd [#allocation5], 0
      %s54 = sshll.u32 %s6, 4
      %s55 = int_to_ptr.hbm [resolvable:$true] %s54
      %s56 = sshll.u32 [#allocation4], 4
      %s57 = int_to_ptr.vmem [resolvable:$true] %s56
      %62 = dma.hbm_to_vmem [thread:$0]  %s55, 1024, %s57, [#allocation5], 128, 128, 8
    $region29: #{tpu_custom_call.1} parent=1 // pred_fallthru
      _
    // Predicated region
    $region30: #{tpu_custom_call.1} parent=1 // pred_check
      _
    $region31: #{tpu_custom_call.1} parent=1 // pred_check_branch
      %64 = sbr.rel (0) target = $region33
    $region32: #{tpu_custom_call.1} parent=1 // pred_region
      _
    $region33: #{tpu_custom_call.1} parent=1 // pred_fallthru
      _
    // Predicated region
    $region34: #{tpu_custom_call.1} parent=1 // pred_check
      _
    $region35: #{tpu_custom_call.1} parent=1 // pred_check_branch
      %66 = sbr.rel (0) target = $region37
    $region36: #{tpu_custom_call.1} parent=1 // pred_region
      _
    $region37: #{tpu_custom_call.1} parent=1 // pred_fallthru
      _
    // Predicated region
    $region38: #{tpu_custom_call.1} parent=1 // pred_check
      _
    $region39: #{tpu_custom_call.1} parent=1 // pred_check_branch
      %68 = sbr.rel (0) target = $region41
    $region40: #{tpu_custom_call.1} parent=1 // pred_region
      _
    $region41: #{tpu_custom_call.1} parent=1 // pred_fallthru
      _
    // Predicated region
    $region42: #{tpu_custom_call.1} parent=1 // pred_check
      _
    $region43: #{tpu_custom_call.1} parent=1 // pred_check_branch
      %70 = sbr.rel (0) target = $region45
    $region44: #{tpu_custom_call.1} parent=1 // pred_region
      _
    $region45: #{tpu_custom_call.1} parent=1 // pred_fallthru
      _
    // Predicated region
    $region46: #{tpu_custom_call.1} parent=1 // pred_check
      _
    $region47: #{tpu_custom_call.1} parent=1 // pred_check_branch
      %72 = sbr.rel (0) target = $region49
    $region48: #{tpu_custom_call.1} parent=1 // pred_region
      _
    $region49: #{tpu_custom_call.1} parent=1 // pred_fallthru
      _
    // Predicated region
    $region50: #{tpu_custom_call.1} parent=1 // pred_check
      _
    $region51: #{tpu_custom_call.1} parent=1 // pred_check_branch
      %74 = sbr.rel (0) target = $region53
    $region52: #{tpu_custom_call.1} parent=1 // pred_region
      _
    $region53: #{tpu_custom_call.1} parent=1 // pred_fallthru
      _
    // Predicated region
    $region54: #{tpu_custom_call.1} parent=1 // pred_check
      _
    $region55: #{tpu_custom_call.1} parent=1 // pred_check_branch
      %76 = sbr.rel (0) target = $region57
    $region56: #{tpu_custom_call.1} parent=1 // pred_region
      _
    $region57: #{tpu_custom_call.1} parent=1 // pred_fallthru
      _
    // Predicated region
    $region58: #{tpu_custom_call.1} parent=1 // pred_check
      _
    $region59: #{tpu_custom_call.1} parent=1 // pred_check_branch
      %78 = sbr.rel (0) target = $region61
    $region60: #{tpu_custom_call.1} parent=1 // pred_region
      _
    $region61: #{tpu_custom_call.1} parent=1 // pred_fallthru
      _
    // Predicated region
    $region62: #{tpu_custom_call.1} parent=1 // pred_check
      _
    $region63: #{tpu_custom_call.1} parent=1 // pred_check_branch
      %80 = sbr.rel (0) target = $region65
    $region64: #{tpu_custom_call.1} parent=1 // pred_region
      _
    $region65: #{tpu_custom_call.1} parent=1 // pred_fallthru
      _
    // Predicated region
    $region66: #{tpu_custom_call.1} parent=1 // pred_check
      _
    $region67: #{tpu_custom_call.1} parent=1 // pred_check_branch
      %82 = sbr.rel (0) target = $region69
    $region68: #{tpu_custom_call.1} parent=1 // pred_region
      _
    $region69: #{tpu_custom_call.1} parent=1 // pred_fallthru
      _
    // Predicated region
    $region70: #{tpu_custom_call.1} parent=1 // pred_check
      _
    $region71: #{tpu_custom_call.1} parent=1 // pred_check_branch
      %84 = sbr.rel (0) target = $region73
    $region72: #{tpu_custom_call.1} parent=1 // pred_region
      _
    $region73: #{tpu_custom_call.1} parent=1 // pred_fallthru
      _
    // Predicated region
    $region74: #{tpu_custom_call.1} parent=1 // pred_check
      _
    $region75: #{tpu_custom_call.1} parent=1 // pred_check_branch
      %86 = sbr.rel (0) target = $region77
    $region76: #{tpu_custom_call.1} parent=1 // pred_region
      %88 = dma.done [#allocation3], 1024
    $region77: #{tpu_custom_call.1} parent=1 // pred_fallthru
      _
    // Predicated region
    $region78: #{tpu_custom_call.1} parent=1 // pred_check
      _
    $region79: #{tpu_custom_call.1} parent=1 // pred_check_branch
      %90 = sbr.rel (0) target = $region81
    $region80: #{tpu_custom_call.1} parent=1 // pred_region
      %92 = dma.done [#allocation5], 1024
    $region81: #{tpu_custom_call.1} parent=1 // pred_fallthru
      _
    %v93 = vld [vmem:[%s0] sm:$0xff]
    %v94 = vld [vmem:[%s0 + $0x8] sm:$0xff]
    %v95 = vld [vmem:[%s1] sm:$0xff]
    %v96 = vld [vmem:[%s1 + $0x8] sm:$0xff]
    %v97 = vld [vmem:[%s2] sm:$0xff]
    %vm98 = vcmask 64512
    %v100 = vsel %vm98, %v95, 0
    %v103 = vsel %vm98, %v96, 0
    %105 = vmatpush.msra.mxu0 0.0
    %106 = vmatpush.msra.mxu0 0.0
    %107 = vmatpush.msra.mxu0 0.0
    %108 = vmatpush.msra.mxu0 0.0
    %109 = vmatpush.msra.mxu0 0.0
    %110 = vmatpush.msra.mxu0 0.0
    %111 = vmatpush.msra.mxu0 0.0
    %112 = vmatpush.msra.mxu0 0.0
    %113 = vmatpush.msra.mxu0 0.0
    %114 = vmatpush.msra.mxu0 0.0
    %115 = vmatpush.msra.mxu0 0.0
    %116 = vmatpush.msra.mxu0 0.0
    %117 = vmatpush.msra.mxu0 0.0
    %118 = vmatpush.msra.mxu0 0.0
    %119 = vmatpush.msra.mxu0 0.0
    %120 = vmatpush.msra.mxu0 %v97
    %121 = vmatmul.f32.gmra.mxu0 %v100
    %v122 = vpop.f32.mrf.mxu0
    %v123 = vadd.f32 0.0, %v122
    %124 = vmatmul.f32.gmra.mxu0 %v103
    %v125 = vpop.f32.mrf.mxu0
    %v126 = vadd.f32 0.0, %v125
    %127 = vdwg.mxu0
    %v128 = vadd.f32 %v93, %v123
    %v129 = vadd.f32 %v94, %v126
    %v130 = vld [vmem:[%s3] sm:$0x1]
    %v132 = vperm.slane %v130, 0
    %v134 = vadd.f32 %v128, %v132
    %v135 = vadd.f32 %v129, %v132
    %v136 = vld [vmem:[%s4] sm:$0xff]
    %v137 = vld [vmem:[#allocation2] sm:$0xff]
    %v138 = vld [vmem:[#allocation2 + $0x8] sm:$0xff]
    %v139 = vld [vmem:[#allocation2 + $0x10] sm:$0xff]
    %v140 = vld [vmem:[#allocation2 + $0x18] sm:$0xff]
    %vm141 = vcmask 261120
    %v143 = vsel %vm141, %v134, 0
    %v146 = vsel %vm141, %v135, 0
    %148 = vmatpush.msra.mxu0 0.0
    %149 = vmatpush.msra.mxu0 0.0
    %150 = vmatpush.msra.mxu0 0.0
    %151 = vmatpush.msra.mxu0 0.0
    %152 = vmatpush.msra.mxu0 0.0
    %153 = vmatpush.msra.mxu0 0.0
    %154 = vmatpush.msra.mxu0 0.0
    %155 = vmatpush.msra.mxu0 0.0
    %156 = vmatpush.msra.mxu0 0.0
    %157 = vmatpush.msra.mxu0 0.0
    %158 = vmatpush.msra.mxu0 0.0
    %159 = vmatpush.msra.mxu0 0.0
    %160 = vmatpush.msra.mxu0 %v140
    %161 = vmatpush.msra.mxu0 %v139
    %162 = vmatpush.msra.mxu0 %v138
    %163 = vmatpush.msra.mxu0 %v137
    %164 = vmatmul.f32.gmra.mxu0 %v143
    %v165 = vpop.f32.mrf.mxu0
    %v166 = vadd.f32 0.0, %v165
    %167 = vmatmul.f32.gmra.mxu0 %v146
    %v168 = vpop.f32.mrf.mxu0
    %v169 = vadd.f32 0.0, %v168
    %170 = vdwg.mxu0
    %v171 = vld [vmem:[#allocation4] sm:$0xff]
    %v172 = vld [vmem:[#allocation4 + $0x8] sm:$0xff]
    %v173 = vld [vmem:[#allocation4 + $0x10] sm:$0xff]
    %v174 = vld [vmem:[#allocation4 + $0x18] sm:$0xff]
    %v176 = vsel %vm141, %v136, 0
    %178 = vmatpush.msra.mxu0 0.0
    %179 = vmatpush.msra.mxu0 0.0
    %180 = vmatpush.msra.mxu0 0.0
    %181 = vmatpush.msra.mxu0 0.0
    %182 = vmatpush.msra.mxu0 0.0
    %183 = vmatpush.msra.mxu0 0.0
    %184 = vmatpush.msra.mxu0 0.0
    %185 = vmatpush.msra.mxu0 0.0
    %186 = vmatpush.msra.mxu0 0.0
    %187 = vmatpush.msra.mxu0 0.0
    %188 = vmatpush.msra.mxu0 0.0
    %189 = vmatpush.msra.mxu0 0.0
    %190 = vmatpush.msra.mxu0 %v174
    %191 = vmatpush.msra.mxu0 %v173
    %192 = vmatpush.msra.mxu0 %v172
    %193 = vmatpush.msra.mxu0 %v171
    %194 = vmatmul.f32.gmra.mxu0 %v176
    %v195 = vpop.f32.mrf.mxu0
    %v196 = vadd.f32 0.0, %v195
    %197 = vdwg.mxu0
    %v198 = vld [vmem:[%s10] sm:$0xff]
    %v199 = vld [vmem:[%s10 + $0x8] sm:$0xff]
    %v200 = vld [vmem:[%s10 + $0x10] sm:$0xff]
    %v201 = vld [vmem:[%s11] sm:$0xff]
    %v202 = vld [vmem:[%s11 + $0x8] sm:$0xff]
    %v203 = vld [vmem:[%s11 + $0x10] sm:$0xff]
    %v205 = vsel %vm98, %v201, 0
    %v208 = vsel %vm98, %v202, 0
    %v211 = vsel %vm98, %v203, 0
    %213 = vmatpush.msra.mxu0 0.0
    %214 = vmatpush.msra.mxu0 0.0
    %215 = vmatpush.msra.mxu0 0.0
    %216 = vmatpush.msra.mxu0 0.0
    %217 = vmatpush.msra.mxu0 0.0
    %218 = vmatpush.msra.mxu0 0.0
    %219 = vmatpush.msra.mxu0 0.0
    %220 = vmatpush.msra.mxu0 0.0
    %221 = vmatpush.msra.mxu0 0.0
    %222 = vmatpush.msra.mxu0 0.0
    %223 = vmatpush.msra.mxu0 0.0
    %224 = vmatpush.msra.mxu0 0.0
    %225 = vmatpush.msra.mxu0 0.0
    %226 = vmatpush.msra.mxu0 0.0
    %227 = vmatpush.msra.mxu0 0.0
    %228 = vmatpush.msra.mxu0 %v196
    %229 = vmatmul.f32.gmra.mxu0 %v205
    %v230 = vpop.f32.mrf.mxu0
    %v231 = vadd.f32 0.0, %v230
    %232 = vmatmul.f32.gmra.mxu0 %v208
    %v233 = vpop.f32.mrf.mxu0
    %v234 = vadd.f32 0.0, %v233
    %235 = vmatmul.f32.gmra.mxu0 %v211
    %v236 = vpop.f32.mrf.mxu0
    %v237 = vadd.f32 0.0, %v236
    %238 = vdwg.mxu0
    %vm239 = vcmask 130048
    %v241 = vsel %vm239, %v198, 0
    %v244 = vsel %vm239, %v199, 0
    %v247 = vsel %vm239, %v200, 0
    %249 = vmatpush.msra.mxu0 0.0
    %250 = vmatpush.msra.mxu0 0.0
    %251 = vmatpush.msra.mxu0 0.0
    %252 = vmatpush.msra.mxu0 0.0
    %253 = vmatpush.msra.mxu0 0.0
    %254 = vmatpush.msra.mxu0 0.0
    %255 = vmatpush.msra.mxu0 0.0
    %256 = vmatpush.msra.mxu0 0.0
    %257 = vmatpush.msra.mxu0 0.0
    %258 = vmatpush.msra.mxu0 0.0
    %259 = vmatpush.msra.mxu0 0.0
    %260 = vmatpush.msra.mxu0 0.0
    %261 = vmatpush.msra.mxu0 0.0
    %262 = vmatpush.msra.mxu0 0.0
    %263 = vmatpush.msra.mxu0 %v169
    %264 = vmatpush.msra.mxu0 %v166
    %265 = vmatmul.f32.gmra.mxu0 %v241
    %v266 = vpop.f32.mrf.mxu0
    %v267 = vadd.f32 %v231, %v266
    %268 = vmatmul.f32.gmra.mxu0 %v244
    %v269 = vpop.f32.mrf.mxu0
    %v270 = vadd.f32 %v234, %v269
    %271 = vmatmul.f32.gmra.mxu0 %v247
    %v272 = vpop.f32.mrf.mxu0
    %v273 = vadd.f32 %v237, %v272
    %274 = vdwg.mxu0
    %v275 = vld [vmem:[%s7] sm:$0x1]
    %v277 = vperm.slane %v275, 0
    %v279 = vadd.f32 %v267, %v277
    %v280 = vadd.f32 %v270, %v277
    %v281 = vadd.f32 %v273, %v277
    %v282 = vld [vmem:[%s8] sm:$0x1]
    %v284 = vperm.slane %v282, 0
    %v286 = vadd.f32 %v279, %v284
    %v287 = vadd.f32 %v280, %v284
    %v288 = vadd.f32 %v281, %v284
    %v289 = vld [vmem:[%s12] sm:$0xff]
    %v290 = vld [vmem:[%s12 + $0x8] sm:$0xff]
    %v291 = vld [vmem:[%s12 + $0x10] sm:$0xff]
    %v292 = vld [vmem:[%s9] sm:$0x1]
    %294 = vset.pattern.permute.xlu0 0
    %295 = vperm.xlu0 %294, %v289
    %v296 = vpop.permute.xlu0 %295
    %299 = vset.pattern.permute.xlu0 0
    %300 = vperm.xlu0 %299, %v290
    %v301 = vpop.permute.xlu0 %300
    %304 = vset.pattern.permute.xlu0 0
    %305 = vperm.xlu0 %304, %v291
    %v306 = vpop.permute.xlu0 %305
    %v309 = vperm.slane %v292, 0
    %v311 = vmul.f32 %v296, %v309
    %v312 = vmul.f32 %v301, %v309
    %v313 = vmul.f32 %v306, %v309
    %v314 = vadd.f32 %v286, %v311
    %v315 = vadd.f32 %v287, %v312
    %v316 = vadd.f32 %v288, %v313
    %v320 = vrot.slane %v314, 1
    %v321 = vrot.slane %v314, 2
    %v322 = vrot.slane %v314, 3
    %v323 = vrot.slane %v314, 4
    %v324 = vrot.slane %v314, 5
    %v325 = vrot.slane %v314, 6
    %v326 = vrot.slane %v314, 7
    %v327 = vrot.slane %v315, 1
    %v328 = vrot.slane %v315, 2
    %v329 = vrot.slane %v315, 3
    %v330 = vrot.slane %v315, 4
    %v331 = vrot.slane %v315, 5
    %v332 = vrot.slane %v315, 6
    %v333 = vrot.slane %v315, 7
    %v334 = vrot.slane %v316, 1
    %v335 = vrot.slane %v316, 2
    %v336 = vrot.slane %v316, 3
    %v337 = vrot.slane %v316, 4
    %v338 = vrot.slane %v316, 5
    %v339 = vrot.slane %v316, 6
    %v340 = vrot.slane %v316, 7
    %v341 = vperm.slane %v201, 0
    %v342 = vlaneseq
    %v343 = vshrl.u32 %v342, 7
    %345 = vset.pattern.permute.xlu0 %v343
    %346 = vperm.xlu0 %345, %v341
    %v347 = vpop.permute.xlu0 %346
    %v348 = vperm.slane %v201, 1
    %v349 = vlaneseq
    %v350 = vshrl.u32 %v349, 7
    %352 = vset.pattern.permute.xlu0 %v350
    %353 = vperm.xlu0 %352, %v348
    %v354 = vpop.permute.xlu0 %353
    %v355 = vperm.slane %v201, 2
    %v356 = vlaneseq
    %v357 = vshrl.u32 %v356, 7
    %359 = vset.pattern.permute.xlu0 %v357
    %360 = vperm.xlu0 %359, %v355
    %v361 = vpop.permute.xlu0 %360
    %v362 = vperm.slane %v201, 3
    %v363 = vlaneseq
    %v364 = vshrl.u32 %v363, 7
    %366 = vset.pattern.permute.xlu0 %v364
    %367 = vperm.xlu0 %366, %v362
    %v368 = vpop.permute.xlu0 %367
    %v369 = vperm.slane %v201, 4
    %v370 = vlaneseq
    %v371 = vshrl.u32 %v370, 7
    %373 = vset.pattern.permute.xlu0 %v371
    %374 = vperm.xlu0 %373, %v369
    %v375 = vpop.permute.xlu0 %374
    %v376 = vperm.slane %v201, 5
    %v377 = vlaneseq
    %v378 = vshrl.u32 %v377, 7
    %380 = vset.pattern.permute.xlu0 %v378
    %381 = vperm.xlu0 %380, %v376
    %v382 = vpop.permute.xlu0 %381
    %v383 = vperm.slane %v201, 6
    %v384 = vlaneseq
    %v385 = vshrl.u32 %v384, 7
    %387 = vset.pattern.permute.xlu0 %v385
    %388 = vperm.xlu0 %387, %v383
    %v389 = vpop.permute.xlu0 %388
    %v390 = vperm.slane %v201, 7
    %v391 = vlaneseq
    %v392 = vshrl.u32 %v391, 7
    %394 = vset.pattern.permute.xlu0 %v392
    %395 = vperm.xlu0 %394, %v390
    %v396 = vpop.permute.xlu0 %395
    %v397 = vperm.slane %v202, 0
    %v398 = vlaneseq
    %v399 = vshrl.u32 %v398, 7
    %401 = vset.pattern.permute.xlu0 %v399
    %402 = vperm.xlu0 %401, %v397
    %v403 = vpop.permute.xlu0 %402
    %v404 = vperm.slane %v202, 1
    %v405 = vlaneseq
    %v406 = vshrl.u32 %v405, 7
    %408 = vset.pattern.permute.xlu0 %v406
    %409 = vperm.xlu0 %408, %v404
    %v410 = vpop.permute.xlu0 %409
    %v411 = vperm.slane %v202, 2
    %v412 = vlaneseq
    %v413 = vshrl.u32 %v412, 7
    %415 = vset.pattern.permute.xlu0 %v413
    %416 = vperm.xlu0 %415, %v411
    %v417 = vpop.permute.xlu0 %416
    %v418 = vperm.slane %v202, 3
    %v419 = vlaneseq
    %v420 = vshrl.u32 %v419, 7
    %422 = vset.pattern.permute.xlu0 %v420
    %423 = vperm.xlu0 %422, %v418
    %v424 = vpop.permute.xlu0 %423
    %v425 = vperm.slane %v202, 4
    %v426 = vlaneseq
    %v427 = vshrl.u32 %v426, 7
    %429 = vset.pattern.permute.xlu0 %v427
    %430 = vperm.xlu0 %429, %v425
    %v431 = vpop.permute.xlu0 %430
    %v432 = vperm.slane %v202, 5
    %v433 = vlaneseq
    %v434 = vshrl.u32 %v433, 7
    %436 = vset.pattern.permute.xlu0 %v434
    %437 = vperm.xlu0 %436, %v432
    %v438 = vpop.permute.xlu0 %437
    %v439 = vperm.slane %v202, 6
    %v440 = vlaneseq
    %v441 = vshrl.u32 %v440, 7
    %443 = vset.pattern.permute.xlu0 %v441
    %444 = vperm.xlu0 %443, %v439
    %v445 = vpop.permute.xlu0 %444
    %v446 = vperm.slane %v202, 7
    %v447 = vlaneseq
    %v448 = vshrl.u32 %v447, 7
    %450 = vset.pattern.permute.xlu0 %v448
    %451 = vperm.xlu0 %450, %v446
    %v452 = vpop.permute.xlu0 %451
    %v453 = vperm.slane %v203, 0
    %v454 = vlaneseq
    %v455 = vshrl.u32 %v454, 7
    %457 = vset.pattern.permute.xlu0 %v455
    %458 = vperm.xlu0 %457, %v453
    %v459 = vpop.permute.xlu0 %458
    %v460 = vperm.slane %v203, 1
    %v461 = vlaneseq
    %v462 = vshrl.u32 %v461, 7
    %464 = vset.pattern.permute.xlu0 %v462
    %465 = vperm.xlu0 %464, %v460
    %v466 = vpop.permute.xlu0 %465
    %v467 = vperm.slane %v203, 2
    %v468 = vlaneseq
    %v469 = vshrl.u32 %v468, 7
    %471 = vset.pattern.permute.xlu0 %v469
    %472 = vperm.xlu0 %471, %v467
    %v473 = vpop.permute.xlu0 %472
    %v474 = vperm.slane %v203, 3
    %v475 = vlaneseq
    %v476 = vshrl.u32 %v475, 7
    %478 = vset.pattern.permute.xlu0 %v476
    %479 = vperm.xlu0 %478, %v474
    %v480 = vpop.permute.xlu0 %479
    %v481 = vperm.slane %v203, 4
    %v482 = vlaneseq
    %v483 = vshrl.u32 %v482, 7
    %485 = vset.pattern.permute.xlu0 %v483
    %486 = vperm.xlu0 %485, %v481
    %v487 = vpop.permute.xlu0 %486
    %v488 = vperm.slane %v203, 5
    %v489 = vlaneseq
    %v490 = vshrl.u32 %v489, 7
    %492 = vset.pattern.permute.xlu0 %v490
    %493 = vperm.xlu0 %492, %v488
    %v494 = vpop.permute.xlu0 %493
    %v495 = vperm.slane %v203, 6
    %v496 = vlaneseq
    %v497 = vshrl.u32 %v496, 7
    %499 = vset.pattern.permute.xlu0 %v497
    %500 = vperm.xlu0 %499, %v495
    %v501 = vpop.permute.xlu0 %500
    %v502 = vperm.slane %v203, 7
    %v503 = vlaneseq
    %v504 = vshrl.u32 %v503, 7
    %506 = vset.pattern.permute.xlu0 %v504
    %507 = vperm.xlu0 %506, %v502
    %v508 = vpop.permute.xlu0 %507
    %v509 = vperm.slane %v314, 0
    %v510 = vperm.slane %v320, 0
    %v511 = vperm.slane %v321, 0
    %v512 = vperm.slane %v322, 0
    %v513 = vperm.slane %v323, 0
    %v514 = vperm.slane %v324, 0
    %v515 = vperm.slane %v325, 0
    %v516 = vperm.slane %v326, 0
    %v517 = vperm.slane %v315, 0
    %v518 = vperm.slane %v327, 0
    %v519 = vperm.slane %v328, 0
    %v520 = vperm.slane %v329, 0
    %v521 = vperm.slane %v330, 0
    %v522 = vperm.slane %v331, 0
    %v523 = vperm.slane %v332, 0
    %v524 = vperm.slane %v333, 0
    %v525 = vperm.slane %v316, 0
    %v526 = vperm.slane %v334, 0
    %v527 = vperm.slane %v335, 0
    %v528 = vperm.slane %v336, 0
    %v529 = vperm.slane %v337, 0
    %v530 = vperm.slane %v338, 0
    %v531 = vperm.slane %v339, 0
    %v532 = vperm.slane %v340, 0
    %v557 = vmul.f32 %v509, %v347
    %v558 = vmul.f32 %v510, %v354
    %v559 = vmul.f32 %v511, %v361
    %v560 = vmul.f32 %v512, %v368
    %v561 = vmul.f32 %v513, %v375
    %v562 = vmul.f32 %v514, %v382
    %v563 = vmul.f32 %v515, %v389
    %v564 = vmul.f32 %v516, %v396
    %v565 = vmul.f32 %v517, %v403
    %v566 = vmul.f32 %v518, %v410
    %v567 = vmul.f32 %v519, %v417
    %v568 = vmul.f32 %v520, %v424
    %v569 = vmul.f32 %v521, %v431
    %v570 = vmul.f32 %v522, %v438
    %v571 = vmul.f32 %v523, %v445
    %v572 = vmul.f32 %v524, %v452
    %v573 = vmul.f32 %v525, %v459
    %v574 = vmul.f32 %v526, %v466
    %v575 = vmul.f32 %v527, %v473
    %v576 = vmul.f32 %v528, %v480
    %v577 = vmul.f32 %v529, %v487
    %v578 = vmul.f32 %v530, %v494
    %v579 = vmul.f32 %v531, %v501
    %v580 = vmul.f32 %v532, %v508
    %v581 = vsel %vm141, %v557, -inf
    %v582 = vsel %vm141, %v558, -inf
    %v583 = vsel %vm141, %v559, -inf
    %v584 = vsel %vm141, %v560, -inf
    %v585 = vsel %vm141, %v561, -inf
    %v586 = vmax.f32 %v581, %v585
    %v587 = vsel %vm141, %v562, -inf
    %v588 = vmax.f32 %v582, %v587
    %v589 = vsel %vm141, %v563, -inf
    %v590 = vmax.f32 %v583, %v589
    %v591 = vsel %vm141, %v564, -inf
    %v592 = vmax.f32 %v584, %v591
    %v593 = vsel %vm141, %v565, -inf
    %v594 = vmax.f32 %v586, %v593
    %v595 = vsel %vm141, %v566, -inf
    %v596 = vmax.f32 %v588, %v595
    %v597 = vsel %vm141, %v567, -inf
    %v598 = vmax.f32 %v590, %v597
    %v599 = vsel %vm141, %v568, -inf
    %v600 = vmax.f32 %v592, %v599
    %v601 = vsel %vm141, %v569, -inf
    %v602 = vmax.f32 %v594, %v601
    %v603 = vsel %vm141, %v570, -inf
    %v604 = vmax.f32 %v596, %v603
    %v605 = vsel %vm141, %v571, -inf
    %v606 = vmax.f32 %v598, %v605
    %v607 = vsel %vm141, %v572, -inf
    %v608 = vmax.f32 %v600, %v607
    %v609 = vsel %vm141, %v573, -inf
    %v610 = vmax.f32 %v602, %v609
    %v611 = vsel %vm141, %v574, -inf
    %v612 = vmax.f32 %v604, %v611
    %v613 = vsel %vm141, %v575, -inf
    %v614 = vmax.f32 %v606, %v613
    %v615 = vsel %vm141, %v576, -inf
    %v616 = vmax.f32 %v608, %v615
    %v617 = vsel %vm141, %v577, -inf
    %v618 = vmax.f32 %v610, %v617
    %v619 = vsel %vm141, %v578, -inf
    %v620 = vmax.f32 %v612, %v619
    %v621 = vsel %vm141, %v579, -inf
    %v622 = vmax.f32 %v614, %v621
    %v623 = vsel %vm141, %v580, -inf
    %v624 = vmax.f32 %v616, %v623
    %v625 = vmax.f32 %v618, %v620
    %v626 = vmax.f32 %v622, %v624
    %v627 = vmax.f32 %v625, %v626
    %v628 = vadd.f32 %v627, 0.0
    %v629 = vld [vmem:[%s13] sm:$0xff]
    %v630 = vld [vmem:[%s13 + $0x8] sm:$0xff]
    %v631 = vld [vmem:[%s13 + $0x10] sm:$0xff]
    %v632 = vld [vmem:[%s14] sm:$0xff]
    %v633 = vld [vmem:[%s14 + $0x8] sm:$0xff]
    %v634 = vld [vmem:[%s14 + $0x10] sm:$0xff]
    %637 = vrot.lane.b32.xlu0 %v166, 96
    %v638 = vpop.permute.xlu0 %637
    %639 = vrot.lane.b32.xlu0 %v169, 96
    %v640 = vpop.permute.xlu0 %639
    %v644 = vsel %vm239, %v632, 0
    %v647 = vsel %vm239, %v633, 0
    %v650 = vsel %vm239, %v634, 0
    %652 = vmatpush.msra.mxu0 0.0
    %653 = vmatpush.msra.mxu0 0.0
    %654 = vmatpush.msra.mxu0 0.0
    %655 = vmatpush.msra.mxu0 0.0
    %656 = vmatpush.msra.mxu0 0.0
    %657 = vmatpush.msra.mxu0 0.0
    %658 = vmatpush.msra.mxu0 0.0
    %659 = vmatpush.msra.mxu0 0.0
    %660 = vmatpush.msra.mxu0 0.0
    %661 = vmatpush.msra.mxu0 0.0
    %662 = vmatpush.msra.mxu0 0.0
    %663 = vmatpush.msra.mxu0 0.0
    %664 = vmatpush.msra.mxu0 0.0
    %665 = vmatpush.msra.mxu0 0.0
    %666 = vmatpush.msra.mxu0 %v640
    %667 = vmatpush.msra.mxu0 %v638
    %668 = vmatmul.f32.gmra.mxu0 %v644
    %v669 = vpop.f32.mrf.mxu0
    %v670 = vadd.f32 0.0, %v669
    %671 = vmatmul.f32.gmra.mxu0 %v647
    %v672 = vpop.f32.mrf.mxu0
    %v673 = vadd.f32 0.0, %v672
    %674 = vmatmul.f32.gmra.mxu0 %v650
    %v675 = vpop.f32.mrf.mxu0
    %v676 = vadd.f32 0.0, %v675
    %677 = vdwg.mxu0
    %679 = vrot.lane.b32.xlu0 %v196, 96
    %v680 = vpop.permute.xlu0 %679
    %v683 = vsel %vm98, %v629, 0
    %v686 = vsel %vm98, %v630, 0
    %v689 = vsel %vm98, %v631, 0
    %691 = vmatpush.msra.mxu0 0.0
    %692 = vmatpush.msra.mxu0 0.0
    %693 = vmatpush.msra.mxu0 0.0
    %694 = vmatpush.msra.mxu0 0.0
    %695 = vmatpush.msra.mxu0 0.0
    %696 = vmatpush.msra.mxu0 0.0
    %697 = vmatpush.msra.mxu0 0.0
    %698 = vmatpush.msra.mxu0 0.0
    %699 = vmatpush.msra.mxu0 0.0
    %700 = vmatpush.msra.mxu0 0.0
    %701 = vmatpush.msra.mxu0 0.0
    %702 = vmatpush.msra.mxu0 0.0
    %703 = vmatpush.msra.mxu0 0.0
    %704 = vmatpush.msra.mxu0 0.0
    %705 = vmatpush.msra.mxu0 0.0
    %706 = vmatpush.msra.mxu0 %v680
    %707 = vmatmul.f32.gmra.mxu0 %v683
    %v708 = vpop.f32.mrf.mxu0
    %v709 = vadd.f32 %v670, %v708
    %710 = vmatmul.f32.gmra.mxu0 %v686
    %v711 = vpop.f32.mrf.mxu0
    %v712 = vadd.f32 %v673, %v711
    %713 = vmatmul.f32.gmra.mxu0 %v689
    %v714 = vpop.f32.mrf.mxu0
    %v715 = vadd.f32 %v676, %v714
    %716 = vdwg.mxu0
    %s717 = scalar_lea.vmem %s7, 1
    %v718 = vld [vmem:[%s717] sm:$0x1]
    %v720 = vperm.slane %v718, 0
    %v722 = vadd.f32 %v709, %v720
    %v723 = vadd.f32 %v712, %v720
    %v724 = vadd.f32 %v715, %v720
    %s725 = scalar_lea.vmem %s8, 1
    %v726 = vld [vmem:[%s725] sm:$0x1]
    %v728 = vperm.slane %v726, 0
    %v730 = vadd.f32 %v722, %v728
    %v731 = vadd.f32 %v723, %v728
    %v732 = vadd.f32 %v724, %v728
    %v733 = vld [vmem:[%s15] sm:$0xff]
    %v734 = vld [vmem:[%s15 + $0x8] sm:$0xff]
    %v735 = vld [vmem:[%s15 + $0x10] sm:$0xff]
    %s736 = scalar_lea.vmem %s9, 1
    %v737 = vld [vmem:[%s736] sm:$0x1]
    %739 = vset.pattern.permute.xlu0 0
    %740 = vperm.xlu0 %739, %v733
    %v741 = vpop.permute.xlu0 %740
    %744 = vset.pattern.permute.xlu0 0
    %745 = vperm.xlu0 %744, %v734
    %v746 = vpop.permute.xlu0 %745
    %749 = vset.pattern.permute.xlu0 0
    %750 = vperm.xlu0 %749, %v735
    %v751 = vpop.permute.xlu0 %750
    %v754 = vperm.slane %v737, 0
    %v756 = vmul.f32 %v741, %v754
    %v757 = vmul.f32 %v746, %v754
    %v758 = vmul.f32 %v751, %v754
    %v759 = vadd.f32 %v730, %v756
    %v760 = vadd.f32 %v731, %v757
    %v761 = vadd.f32 %v732, %v758
    %v765 = vrot.slane %v759, 1
    %v766 = vrot.slane %v759, 2
    %v767 = vrot.slane %v759, 3
    %v768 = vrot.slane %v759, 4
    %v769 = vrot.slane %v759, 5
    %v770 = vrot.slane %v759, 6
    %v771 = vrot.slane %v759, 7
    %v772 = vrot.slane %v760, 1
    %v773 = vrot.slane %v760, 2
    %v774 = vrot.slane %v760, 3
    %v775 = vrot.slane %v760, 4
    %v776 = vrot.slane %v760, 5
    %v777 = vrot.slane %v760, 6
    %v778 = vrot.slane %v760, 7
    %v779 = vrot.slane %v761, 1
    %v780 = vrot.slane %v761, 2
    %v781 = vrot.slane %v761, 3
    %v782 = vrot.slane %v761, 4
    %v783 = vrot.slane %v761, 5
    %v784 = vrot.slane %v761, 6
    %v785 = vrot.slane %v761, 7
    %v786 = vperm.slane %v632, 0
    %v787 = vlaneseq
    %v788 = vshrl.u32 %v787, 7
    %790 = vset.pattern.permute.xlu0 %v788
    %791 = vperm.xlu0 %790, %v786
    %v792 = vpop.permute.xlu0 %791
    %v793 = vlaneseq
    %v794 = vshrl.u32 %v793, 7
    %v795 = vadd.s32 %v794, 8
    %796 = vset.pattern.permute.xlu0 %v795
    %797 = vperm.xlu0 %796, %v786
    %v798 = vpop.permute.xlu0 %797
    %v799 = vperm.slane %v632, 1
    %v800 = vlaneseq
    %v801 = vshrl.u32 %v800, 7
    %803 = vset.pattern.permute.xlu0 %v801
    %804 = vperm.xlu0 %803, %v799
    %v805 = vpop.permute.xlu0 %804
    %v806 = vlaneseq
    %v807 = vshrl.u32 %v806, 7
    %v808 = vadd.s32 %v807, 8
    %809 = vset.pattern.permute.xlu0 %v808
    %810 = vperm.xlu0 %809, %v799
    %v811 = vpop.permute.xlu0 %810
    %v812 = vperm.slane %v632, 2
    %v813 = vlaneseq
    %v814 = vshrl.u32 %v813, 7
    %816 = vset.pattern.permute.xlu0 %v814
    %817 = vperm.xlu0 %816, %v812
    %v818 = vpop.permute.xlu0 %817
    %v819 = vlaneseq
    %v820 = vshrl.u32 %v819, 7
    %v821 = vadd.s32 %v820, 8
    %822 = vset.pattern.permute.xlu0 %v821
    %823 = vperm.xlu0 %822, %v812
    %v824 = vpop.permute.xlu0 %823
    %v825 = vperm.slane %v632, 3
    %v826 = vlaneseq
    %v827 = vshrl.u32 %v826, 7
    %829 = vset.pattern.permute.xlu0 %v827
    %830 = vperm.xlu0 %829, %v825
    %v831 = vpop.permute.xlu0 %830
    %v832 = vlaneseq
    %v833 = vshrl.u32 %v832, 7
    %v834 = vadd.s32 %v833, 8
    %835 = vset.pattern.permute.xlu0 %v834
    %836 = vperm.xlu0 %835, %v825
    %v837 = vpop.permute.xlu0 %836
    %v838 = vperm.slane %v632, 4
    %v839 = vlaneseq
    %v840 = vshrl.u32 %v839, 7
    %842 = vset.pattern.permute.xlu0 %v840
    %843 = vperm.xlu0 %842, %v838
    %v844 = vpop.permute.xlu0 %843
    %v845 = vlaneseq
    %v846 = vshrl.u32 %v845, 7
    %v847 = vadd.s32 %v846, 8
    %848 = vset.pattern.permute.xlu0 %v847
    %849 = vperm.xlu0 %848, %v838
    %v850 = vpop.permute.xlu0 %849
    %v851 = vperm.slane %v632, 5
    %v852 = vlaneseq
    %v853 = vshrl.u32 %v852, 7
    %855 = vset.pattern.permute.xlu0 %v853
    %856 = vperm.xlu0 %855, %v851
    %v857 = vpop.permute.xlu0 %856
    %v858 = vlaneseq
    %v859 = vshrl.u32 %v858, 7
    %v860 = vadd.s32 %v859, 8
    %861 = vset.pattern.permute.xlu0 %v860
    %862 = vperm.xlu0 %861, %v851
    %v863 = vpop.permute.xlu0 %862
    %v864 = vperm.slane %v632, 6
    %v865 = vlaneseq
    %v866 = vshrl.u32 %v865, 7
    %868 = vset.pattern.permute.xlu0 %v866
    %869 = vperm.xlu0 %868, %v864
    %v870 = vpop.permute.xlu0 %869
    %v871 = vlaneseq
    %v872 = vshrl.u32 %v871, 7
    %v873 = vadd.s32 %v872, 8
    %874 = vset.pattern.permute.xlu0 %v873
    %875 = vperm.xlu0 %874, %v864
    %v876 = vpop.permute.xlu0 %875
    %v877 = vperm.slane %v632, 7
    %v878 = vlaneseq
    %v879 = vshrl.u32 %v878, 7
    %881 = vset.pattern.permute.xlu0 %v879
    %882 = vperm.xlu0 %881, %v877
    %v883 = vpop.permute.xlu0 %882
    %v884 = vlaneseq
    %v885 = vshrl.u32 %v884, 7
    %v886 = vadd.s32 %v885, 8
    %887 = vset.pattern.permute.xlu0 %v886
    %888 = vperm.xlu0 %887, %v877
    %v889 = vpop.permute.xlu0 %888
    %v890 = vperm.slane %v633, 0
    %v891 = vlaneseq
    %v892 = vshrl.u32 %v891, 7
    %894 = vset.pattern.permute.xlu0 %v892
    %895 = vperm.xlu0 %894, %v890
    %v896 = vpop.permute.xlu0 %895
    %v897 = vlaneseq
    %v898 = vshrl.u32 %v897, 7
    %v899 = vadd.s32 %v898, 8
    %900 = vset.pattern.permute.xlu0 %v899
    %901 = vperm.xlu0 %900, %v890
    %v902 = vpop.permute.xlu0 %901
    %v903 = vperm.slane %v633, 1
    %v904 = vlaneseq
    %v905 = vshrl.u32 %v904, 7
    %907 = vset.pattern.permute.xlu0 %v905
    %908 = vperm.xlu0 %907, %v903
    %v909 = vpop.permute.xlu0 %908
    %v910 = vlaneseq
    %v911 = vshrl.u32 %v910, 7
    %v912 = vadd.s32 %v911, 8
    %913 = vset.pattern.permute.xlu0 %v912
    %914 = vperm.xlu0 %913, %v903
    %v915 = vpop.permute.xlu0 %914
    %v916 = vperm.slane %v633, 2
    %v917 = vlaneseq
    %v918 = vshrl.u32 %v917, 7
    %920 = vset.pattern.permute.xlu0 %v918
    %921 = vperm.xlu0 %920, %v916
    %v922 = vpop.permute.xlu0 %921
    %v923 = vlaneseq
    %v924 = vshrl.u32 %v923, 7
    %v925 = vadd.s32 %v924, 8
    %926 = vset.pattern.permute.xlu0 %v925
    %927 = vperm.xlu0 %926, %v916
    %v928 = vpop.permute.xlu0 %927
    %v929 = vperm.slane %v633, 3
    %v930 = vlaneseq
    %v931 = vshrl.u32 %v930, 7
    %933 = vset.pattern.permute.xlu0 %v931
    %934 = vperm.xlu0 %933, %v929
    %v935 = vpop.permute.xlu0 %934
    %v936 = vlaneseq
    %v937 = vshrl.u32 %v936, 7
    %v938 = vadd.s32 %v937, 8
    %939 = vset.pattern.permute.xlu0 %v938
    %940 = vperm.xlu0 %939, %v929
    %v941 = vpop.permute.xlu0 %940
    %v942 = vperm.slane %v633, 4
    %v943 = vlaneseq
    %v944 = vshrl.u32 %v943, 7
    %946 = vset.pattern.permute.xlu0 %v944
    %947 = vperm.xlu0 %946, %v942
    %v948 = vpop.permute.xlu0 %947
    %v949 = vlaneseq
    %v950 = vshrl.u32 %v949, 7
    %v951 = vadd.s32 %v950, 8
    %952 = vset.pattern.permute.xlu0 %v951
    %953 = vperm.xlu0 %952, %v942
    %v954 = vpop.permute.xlu0 %953
    %v955 = vperm.slane %v633, 5
    %v956 = vlaneseq
    %v957 = vshrl.u32 %v956, 7
    %959 = vset.pattern.permute.xlu0 %v957
    %960 = vperm.xlu0 %959, %v955
    %v961 = vpop.permute.xlu0 %960
    %v962 = vlaneseq
    %v963 = vshrl.u32 %v962, 7
    %v964 = vadd.s32 %v963, 8
    %965 = vset.pattern.permute.xlu0 %v964
    %966 = vperm.xlu0 %965, %v955
    %v967 = vpop.permute.xlu0 %966
    %v968 = vperm.slane %v633, 6
    %v969 = vlaneseq
    %v970 = vshrl.u32 %v969, 7
    %972 = vset.pattern.permute.xlu0 %v970
    %973 = vperm.xlu0 %972, %v968
    %v974 = vpop.permute.xlu0 %973
    %v975 = vlaneseq
    %v976 = vshrl.u32 %v975, 7
    %v977 = vadd.s32 %v976, 8
    %978 = vset.pattern.permute.xlu0 %v977
    %979 = vperm.xlu0 %978, %v968
    %v980 = vpop.permute.xlu0 %979
    %v981 = vperm.slane %v633, 7
    %v982 = vlaneseq
    %v983 = vshrl.u32 %v982, 7
    %985 = vset.pattern.permute.xlu0 %v983
    %986 = vperm.xlu0 %985, %v981
    %v987 = vpop.permute.xlu0 %986
    %v988 = vlaneseq
    %v989 = vshrl.u32 %v988, 7
    %v990 = vadd.s32 %v989, 8
    %991 = vset.pattern.permute.xlu0 %v990
    %992 = vperm.xlu0 %991, %v981
    %v993 = vpop.permute.xlu0 %992
    %v994 = vperm.slane %v634, 0
    %v995 = vlaneseq
    %v996 = vshrl.u32 %v995, 7
    %998 = vset.pattern.permute.xlu0 %v996
    %999 = vperm.xlu0 %998, %v994
    %v1000 = vpop.permute.xlu0 %999
    %v1001 = vlaneseq
    %v1002 = vshrl.u32 %v1001, 7
    %v1003 = vadd.s32 %v1002, 8
    %1004 = vset.pattern.permute.xlu0 %v1003
    %1005 = vperm.xlu0 %1004, %v994
    %v1006 = vpop.permute.xlu0 %1005
    %v1007 = vperm.slane %v634, 1
    %v1008 = vlaneseq
    %v1009 = vshrl.u32 %v1008, 7
    %1011 = vset.pattern.permute.xlu0 %v1009
    %1012 = vperm.xlu0 %1011, %v1007
    %v1013 = vpop.permute.xlu0 %1012
    %v1014 = vlaneseq
    %v1015 = vshrl.u32 %v1014, 7
    %v1016 = vadd.s32 %v1015, 8
    %1017 = vset.pattern.permute.xlu0 %v1016
    %1018 = vperm.xlu0 %1017, %v1007
    %v1019 = vpop.permute.xlu0 %1018
    %v1020 = vperm.slane %v634, 2
    %v1021 = vlaneseq
    %v1022 = vshrl.u32 %v1021, 7
    %1024 = vset.pattern.permute.xlu0 %v1022
    %1025 = vperm.xlu0 %1024, %v1020
    %v1026 = vpop.permute.xlu0 %1025
    %v1027 = vlaneseq
    %v1028 = vshrl.u32 %v1027, 7
    %v1029 = vadd.s32 %v1028, 8
    %1030 = vset.pattern.permute.xlu0 %v1029
    %1031 = vperm.xlu0 %1030, %v1020
    %v1032 = vpop.permute.xlu0 %1031
    %v1033 = vperm.slane %v634, 3
    %v1034 = vlaneseq
    %v1035 = vshrl.u32 %v1034, 7
    %1037 = vset.pattern.permute.xlu0 %v1035
    %1038 = vperm.xlu0 %1037, %v1033
    %v1039 = vpop.permute.xlu0 %1038
    %v1040 = vlaneseq
    %v1041 = vshrl.u32 %v1040, 7
    %v1042 = vadd.s32 %v1041, 8
    %1043 = vset.pattern.permute.xlu0 %v1042
    %1044 = vperm.xlu0 %1043, %v1033
    %v1045 = vpop.permute.xlu0 %1044
    %v1046 = vperm.slane %v634, 4
    %v1047 = vlaneseq
    %v1048 = vshrl.u32 %v1047, 7
    %1050 = vset.pattern.permute.xlu0 %v1048
    %1051 = vperm.xlu0 %1050, %v1046
    %v1052 = vpop.permute.xlu0 %1051
    %v1053 = vlaneseq
    %v1054 = vshrl.u32 %v1053, 7
    %v1055 = vadd.s32 %v1054, 8
    %1056 = vset.pattern.permute.xlu0 %v1055
    %1057 = vperm.xlu0 %1056, %v1046
    %v1058 = vpop.permute.xlu0 %1057
    %v1059 = vperm.slane %v634, 5
    %v1060 = vlaneseq
    %v1061 = vshrl.u32 %v1060, 7
    %1063 = vset.pattern.permute.xlu0 %v1061
    %1064 = vperm.xlu0 %1063, %v1059
    %v1065 = vpop.permute.xlu0 %1064
    %v1066 = vlaneseq
    %v1067 = vshrl.u32 %v1066, 7
    %v1068 = vadd.s32 %v1067, 8
    %1069 = vset.pattern.permute.xlu0 %v1068
    %1070 = vperm.xlu0 %1069, %v1059
    %v1071 = vpop.permute.xlu0 %1070
    %v1072 = vperm.slane %v634, 6
    %v1073 = vlaneseq
    %v1074 = vshrl.u32 %v1073, 7
    %1076 = vset.pattern.permute.xlu0 %v1074
    %1077 = vperm.xlu0 %1076, %v1072
    %v1078 = vpop.permute.xlu0 %1077
    %v1079 = vlaneseq
    %v1080 = vshrl.u32 %v1079, 7
    %v1081 = vadd.s32 %v1080, 8
    %1082 = vset.pattern.permute.xlu0 %v1081
    %1083 = vperm.xlu0 %1082, %v1072
    %v1084 = vpop.permute.xlu0 %1083
    %v1085 = vperm.slane %v634, 7
    %v1086 = vlaneseq
    %v1087 = vshrl.u32 %v1086, 7
    %1089 = vset.pattern.permute.xlu0 %v1087
    %1090 = vperm.xlu0 %1089, %v1085
    %v1091 = vpop.permute.xlu0 %1090
    %v1092 = vlaneseq
    %v1093 = vshrl.u32 %v1092, 7
    %v1094 = vadd.s32 %v1093, 8
    %1095 = vset.pattern.permute.xlu0 %v1094
    %1096 = vperm.xlu0 %1095, %v1085
    %v1097 = vpop.permute.xlu0 %1096
    %v1098 = vperm.slane %v759, 0
    %v1099 = vperm.slane %v765, 0
    %v1100 = vperm.slane %v766, 0
    %v1101 = vperm.slane %v767, 0
    %v1102 = vperm.slane %v768, 0
    %v1103 = vperm.slane %v769, 0
    %v1104 = vperm.slane %v770, 0
    %v1105 = vperm.slane %v771, 0
    %v1106 = vperm.slane %v760, 0
    %v1107 = vperm.slane %v772, 0
    %v1108 = vperm.slane %v773, 0
    %v1109 = vperm.slane %v774, 0
    %v1110 = vperm.slane %v775, 0
    %v1111 = vperm.slane %v776, 0
    %v1112 = vperm.slane %v777, 0
    %v1113 = vperm.slane %v778, 0
    %v1114 = vperm.slane %v761, 0
    %v1115 = vperm.slane %v779, 0
    %v1116 = vperm.slane %v780, 0
    %v1117 = vperm.slane %v781, 0
    %v1118 = vperm.slane %v782, 0
    %v1119 = vperm.slane %v783, 0
    %v1120 = vperm.slane %v784, 0
    %v1121 = vperm.slane %v785, 0
    %v1146 = vmul.f32 %v1098, %v792
    %v1147 = vmul.f32 %v1098, %v798
    %v1148 = vmul.f32 %v1099, %v805
    %v1149 = vmul.f32 %v1099, %v811
    %v1150 = vmul.f32 %v1100, %v818
    %v1151 = vmul.f32 %v1100, %v824
    %v1152 = vmul.f32 %v1101, %v831
    %v1153 = vmul.f32 %v1101, %v837
    %v1154 = vmul.f32 %v1102, %v844
    %v1155 = vmul.f32 %v1102, %v850
    %v1156 = vmul.f32 %v1103, %v857
    %v1157 = vmul.f32 %v1103, %v863
    %v1158 = vmul.f32 %v1104, %v870
    %v1159 = vmul.f32 %v1104, %v876
    %v1160 = vmul.f32 %v1105, %v883
    %v1161 = vmul.f32 %v1105, %v889
    %v1162 = vmul.f32 %v1106, %v896
    %v1163 = vmul.f32 %v1106, %v902
    %v1164 = vmul.f32 %v1107, %v909
    %v1165 = vmul.f32 %v1107, %v915
    %v1166 = vmul.f32 %v1108, %v922
    %v1167 = vmul.f32 %v1108, %v928
    %v1168 = vmul.f32 %v1109, %v935
    %v1169 = vmul.f32 %v1109, %v941
    %v1170 = vmul.f32 %v1110, %v948
    %v1171 = vmul.f32 %v1110, %v954
    %v1172 = vmul.f32 %v1111, %v961
    %v1173 = vmul.f32 %v1111, %v967
    %v1174 = vmul.f32 %v1112, %v974
    %v1175 = vmul.f32 %v1112, %v980
    %v1176 = vmul.f32 %v1113, %v987
    %v1177 = vmul.f32 %v1113, %v993
    %v1178 = vmul.f32 %v1114, %v1000
    %v1179 = vmul.f32 %v1114, %v1006
    %v1180 = vmul.f32 %v1115, %v1013
    %v1181 = vmul.f32 %v1115, %v1019
    %v1182 = vmul.f32 %v1116, %v1026
    %v1183 = vmul.f32 %v1116, %v1032
    %v1184 = vmul.f32 %v1117, %v1039
    %v1185 = vmul.f32 %v1117, %v1045
    %v1186 = vmul.f32 %v1118, %v1052
    %v1187 = vmul.f32 %v1118, %v1058
    %v1188 = vmul.f32 %v1119, %v1065
    %v1189 = vmul.f32 %v1119, %v1071
    %v1190 = vmul.f32 %v1120, %v1078
    %v1191 = vmul.f32 %v1120, %v1084
    %v1192 = vmul.f32 %v1121, %v1091
    %v1193 = vmul.f32 %v1121, %v1097
    %v1194 = vsel %vm141, %v1146, -inf
    %v1195 = vsel %vm141, %v1148, -inf
    %v1196 = vsel %vm141, %v1150, -inf
    %v1197 = vmax.f32 %v1194, %v1196
    %v1198 = vsel %vm141, %v1152, -inf
    %v1199 = vmax.f32 %v1195, %v1198
    %v1200 = vsel %vm141, %v1154, -inf
    %v1201 = vmax.f32 %v1197, %v1200
    %v1202 = vsel %vm141, %v1156, -inf
    %v1203 = vmax.f32 %v1199, %v1202
    %v1204 = vsel %vm141, %v1158, -inf
    %v1205 = vmax.f32 %v1201, %v1204
    %v1206 = vsel %vm141, %v1160, -inf
    %v1207 = vmax.f32 %v1203, %v1206
    %v1208 = vsel %vm141, %v1162, -inf
    %v1209 = vmax.f32 %v1205, %v1208
    %v1210 = vsel %vm141, %v1164, -inf
    %v1211 = vmax.f32 %v1207, %v1210
    %v1212 = vsel %vm141, %v1166, -inf
    %v1213 = vmax.f32 %v1209, %v1212
    %v1214 = vsel %vm141, %v1168, -inf
    %v1215 = vmax.f32 %v1211, %v1214
    %v1216 = vsel %vm141, %v1170, -inf
    %v1217 = vmax.f32 %v1213, %v1216
    %v1218 = vsel %vm141, %v1172, -inf
    %v1219 = vmax.f32 %v1215, %v1218
    %v1220 = vsel %vm141, %v1174, -inf
    %v1221 = vmax.f32 %v1217, %v1220
    %v1222 = vsel %vm141, %v1176, -inf
    %v1223 = vmax.f32 %v1219, %v1222
    %v1224 = vsel %vm141, %v1178, -inf
    %v1225 = vmax.f32 %v1221, %v1224
    %v1226 = vsel %vm141, %v1180, -inf
    %v1227 = vmax.f32 %v1223, %v1226
    %v1228 = vsel %vm141, %v1182, -inf
    %v1229 = vmax.f32 %v1225, %v1228
    %v1230 = vsel %vm141, %v1184, -inf
    %v1231 = vmax.f32 %v1227, %v1230
    %v1232 = vsel %vm141, %v1186, -inf
    %v1233 = vmax.f32 %v1229, %v1232
    %v1234 = vsel %vm141, %v1188, -inf
    %v1235 = vmax.f32 %v1231, %v1234
    %v1236 = vsel %vm141, %v1190, -inf
    %v1237 = vmax.f32 %v1233, %v1236
    %v1238 = vsel %vm141, %v1192, -inf
    %v1239 = vmax.f32 %v1235, %v1238
    %v1240 = vmax.f32 %v1237, %v1239
    %v1241 = vsel %vm141, %v1147, -inf
    %v1242 = vsel %vm141, %v1149, -inf
    %v1243 = vsel %vm141, %v1151, -inf
    %v1244 = vmax.f32 %v1241, %v1243
    %v1245 = vsel %vm141, %v1153, -inf
    %v1246 = vmax.f32 %v1242, %v1245
    %v1247 = vsel %vm141, %v1155, -inf
    %v1248 = vmax.f32 %v1244, %v1247
    %v1249 = vsel %vm141, %v1157, -inf
    %v1250 = vmax.f32 %v1246, %v1249
    %v1251 = vsel %vm141, %v1159, -inf
    %v1252 = vmax.f32 %v1248, %v1251
    %v1253 = vsel %vm141, %v1161, -inf
    %v1254 = vmax.f32 %v1250, %v1253
    %v1255 = vsel %vm141, %v1163, -inf
    %v1256 = vmax.f32 %v1252, %v1255
    %v1257 = vsel %vm141, %v1165, -inf
    %v1258 = vmax.f32 %v1254, %v1257
    %v1259 = vsel %vm141, %v1167, -inf
    %v1260 = vmax.f32 %v1256, %v1259
    %v1261 = vsel %vm141, %v1169, -inf
    %v1262 = vmax.f32 %v1258, %v1261
    %v1263 = vsel %vm141, %v1171, -inf
    %v1264 = vmax.f32 %v1260, %v1263
    %v1265 = vsel %vm141, %v1173, -inf
    %v1266 = vmax.f32 %v1262, %v1265
    %v1267 = vsel %vm141, %v1175, -inf
    %v1268 = vmax.f32 %v1264, %v1267
    %v1269 = vsel %vm141, %v1177, -inf
    %v1270 = vmax.f32 %v1266, %v1269
    %v1271 = vsel %vm141, %v1179, -inf
    %v1272 = vmax.f32 %v1268, %v1271
    %v1273 = vsel %vm141, %v1181, -inf
    %v1274 = vmax.f32 %v1270, %v1273
    %v1275 = vsel %vm141, %v1183, -inf
    %v1276 = vmax.f32 %v1272, %v1275
    %v1277 = vsel %vm141, %v1185, -inf
    %v1278 = vmax.f32 %v1274, %v1277
    %v1279 = vsel %vm141, %v1187, -inf
    %v1280 = vmax.f32 %v1276, %v1279
    %v1281 = vsel %vm141, %v1189, -inf
    %v1282 = vmax.f32 %v1278, %v1281
    %v1283 = vsel %vm141, %v1191, -inf
    %v1284 = vmax.f32 %v1280, %v1283
    %v1285 = vsel %vm141, %v1193, -inf
    %v1286 = vmax.f32 %v1282, %v1285
    %v1287 = vmax.f32 %v1284, %v1286
    %v1288 = vadd.f32 %v1240, 0.0
    %v1289 = vadd.f32 %v1287, 0.0
    %v1290 = vmax.f32 %v1288, 0.0
    %v1291 = vmax.f32 %v1289, 0.0
    %v1292 = vmax.f32 %v628, 0.0
    %s1293 = scalar_lea.vmem [#allocation2], 32
    %v1294 = vld [vmem:[%s1293] sm:$0xff]
    %v1295 = vld [vmem:[%s1293 + $0x8] sm:$0xff]
    %v1296 = vld [vmem:[%s1293 + $0x10] sm:$0xff]
    %v1297 = vld [vmem:[%s1293 + $0x18] sm:$0xff]
    %v1299 = vsel %vm141, %v1290, 0
    %v1302 = vsel %vm141, %v1291, 0
    %1304 = vmatpush.msra.mxu0 0.0
    %1305 = vmatpush.msra.mxu0 0.0
    %1306 = vmatpush.msra.mxu0 0.0
    %1307 = vmatpush.msra.mxu0 0.0
    %1308 = vmatpush.msra.mxu0 0.0
    %1309 = vmatpush.msra.mxu0 0.0
    %1310 = vmatpush.msra.mxu0 0.0
    %1311 = vmatpush.msra.mxu0 0.0
    %1312 = vmatpush.msra.mxu0 0.0
    %1313 = vmatpush.msra.mxu0 0.0
    %1314 = vmatpush.msra.mxu0 0.0
    %1315 = vmatpush.msra.mxu0 0.0
    %1316 = vmatpush.msra.mxu0 %v1297
    %1317 = vmatpush.msra.mxu0 %v1296
    %1318 = vmatpush.msra.mxu0 %v1295
    %1319 = vmatpush.msra.mxu0 %v1294
    %1320 = vmatmul.f32.gmra.mxu0 %v1299
    %v1321 = vpop.f32.mrf.mxu0
    %v1322 = vadd.f32 0.0, %v1321
    %1323 = vmatmul.f32.gmra.mxu0 %v1302
    %v1324 = vpop.f32.mrf.mxu0
    %v1325 = vadd.f32 0.0, %v1324
    %1326 = vdwg.mxu0
    %s1327 = scalar_lea.vmem [#allocation4], 32
    %v1328 = vld [vmem:[%s1327] sm:$0xff]
    %v1329 = vld [vmem:[%s1327 + $0x8] sm:$0xff]
    %v1330 = vld [vmem:[%s1327 + $0x10] sm:$0xff]
    %v1331 = vld [vmem:[%s1327 + $0x18] sm:$0xff]
    %v1333 = vsel %vm141, %v1292, 0
    %1335 = vmatpush.msra.mxu0 0.0
    %1336 = vmatpush.msra.mxu0 0.0
    %1337 = vmatpush.msra.mxu0 0.0
    %1338 = vmatpush.msra.mxu0 0.0
    %1339 = vmatpush.msra.mxu0 0.0
    %1340 = vmatpush.msra.mxu0 0.0
    %1341 = vmatpush.msra.mxu0 0.0
    %1342 = vmatpush.msra.mxu0 0.0
    %1343 = vmatpush.msra.mxu0 0.0
    %1344 = vmatpush.msra.mxu0 0.0
    %1345 = vmatpush.msra.mxu0 0.0
    %1346 = vmatpush.msra.mxu0 0.0
    %1347 = vmatpush.msra.mxu0 %v1331
    %1348 = vmatpush.msra.mxu0 %v1330
    %1349 = vmatpush.msra.mxu0 %v1329
    %1350 = vmatpush.msra.mxu0 %v1328
    %1351 = vmatmul.f32.gmra.mxu0 %v1333
    %v1352 = vpop.f32.mrf.mxu0
    %v1353 = vadd.f32 0.0, %v1352
    %1354 = vdwg.mxu0
    %1357 = vrot.lane.b32.xlu0 %v1322, 96
    %v1358 = vpop.permute.xlu0 %1357
    %1359 = vrot.lane.b32.xlu0 %v1325, 96
    %v1360 = vpop.permute.xlu0 %1359
    %1363 = vmatpush.msra.mxu0 0.0
    %1364 = vmatpush.msra.mxu0 0.0
    %1365 = vmatpush.msra.mxu0 0.0
    %1366 = vmatpush.msra.mxu0 0.0
    %1367 = vmatpush.msra.mxu0 0.0
    %1368 = vmatpush.msra.mxu0 0.0
    %1369 = vmatpush.msra.mxu0 0.0
    %1370 = vmatpush.msra.mxu0 0.0
    %1371 = vmatpush.msra.mxu0 0.0
    %1372 = vmatpush.msra.mxu0 0.0
    %1373 = vmatpush.msra.mxu0 0.0
    %1374 = vmatpush.msra.mxu0 0.0
    %1375 = vmatpush.msra.mxu0 0.0
    %1376 = vmatpush.msra.mxu0 0.0
    %1377 = vmatpush.msra.mxu0 %v1360
    %1378 = vmatpush.msra.mxu0 %v1358
    %1379 = vmatmul.f32.gmra.mxu0 %v644
    %v1380 = vpop.f32.mrf.mxu0
    %v1381 = vadd.f32 0.0, %v1380
    %1382 = vmatmul.f32.gmra.mxu0 %v647
    %v1383 = vpop.f32.mrf.mxu0
    %v1384 = vadd.f32 0.0, %v1383
    %1385 = vmatmul.f32.gmra.mxu0 %v650
    %v1386 = vpop.f32.mrf.mxu0
    %v1387 = vadd.f32 0.0, %v1386
    %1388 = vdwg.mxu0
    %1390 = vrot.lane.b32.xlu0 %v1353, 96
    %v1391 = vpop.permute.xlu0 %1390
    %1393 = vmatpush.msra.mxu0 0.0
    %1394 = vmatpush.msra.mxu0 0.0
    %1395 = vmatpush.msra.mxu0 0.0
    %1396 = vmatpush.msra.mxu0 0.0
    %1397 = vmatpush.msra.mxu0 0.0
    %1398 = vmatpush.msra.mxu0 0.0
    %1399 = vmatpush.msra.mxu0 0.0
    %1400 = vmatpush.msra.mxu0 0.0
    %1401 = vmatpush.msra.mxu0 0.0
    %1402 = vmatpush.msra.mxu0 0.0
    %1403 = vmatpush.msra.mxu0 0.0
    %1404 = vmatpush.msra.mxu0 0.0
    %1405 = vmatpush.msra.mxu0 0.0
    %1406 = vmatpush.msra.mxu0 0.0
    %1407 = vmatpush.msra.mxu0 0.0
    %1408 = vmatpush.msra.mxu0 %v1391
    %1409 = vmatmul.f32.gmra.mxu0 %v683
    %v1410 = vpop.f32.mrf.mxu0
    %v1411 = vadd.f32 %v1381, %v1410
    %1412 = vmatmul.f32.gmra.mxu0 %v686
    %v1413 = vpop.f32.mrf.mxu0
    %v1414 = vadd.f32 %v1384, %v1413
    %1415 = vmatmul.f32.gmra.mxu0 %v689
    %v1416 = vpop.f32.mrf.mxu0
    %v1417 = vadd.f32 %v1387, %v1416
    %1418 = vdwg.mxu0
    %s1419 = scalar_lea.vmem %s7, 3
    %v1420 = vld [vmem:[%s1419] sm:$0x1]
    %v1422 = vperm.slane %v1420, 0
    %v1424 = vadd.f32 %v1411, %v1422
    %v1425 = vadd.f32 %v1414, %v1422
    %v1426 = vadd.f32 %v1417, %v1422
    %s1427 = scalar_lea.vmem %s8, 3
    %v1428 = vld [vmem:[%s1427] sm:$0x1]
    %v1430 = vperm.slane %v1428, 0
    %v1432 = vadd.f32 %v1424, %v1430
    %v1433 = vadd.f32 %v1425, %v1430
    %v1434 = vadd.f32 %v1426, %v1430
    %s1435 = scalar_lea.vmem %s9, 3
    %v1436 = vld [vmem:[%s1435] sm:$0x1]
    %v1438 = vperm.slane %v1436, 0
    %v1440 = vmul.f32 %v741, %v1438
    %v1441 = vmul.f32 %v746, %v1438
    %v1442 = vmul.f32 %v751, %v1438
    %v1443 = vadd.f32 %v1432, %v1440
    %v1444 = vadd.f32 %v1433, %v1441
    %v1445 = vadd.f32 %v1434, %v1442
    %v1449 = vrot.slane %v1443, 1
    %v1450 = vrot.slane %v1443, 2
    %v1451 = vrot.slane %v1443, 3
    %v1452 = vrot.slane %v1443, 4
    %v1453 = vrot.slane %v1443, 5
    %v1454 = vrot.slane %v1443, 6
    %v1455 = vrot.slane %v1443, 7
    %v1456 = vrot.slane %v1444, 1
    %v1457 = vrot.slane %v1444, 2
    %v1458 = vrot.slane %v1444, 3
    %v1459 = vrot.slane %v1444, 4
    %v1460 = vrot.slane %v1444, 5
    %v1461 = vrot.slane %v1444, 6
    %v1462 = vrot.slane %v1444, 7
    %v1463 = vrot.slane %v1445, 1
    %v1464 = vrot.slane %v1445, 2
    %v1465 = vrot.slane %v1445, 3
    %v1466 = vrot.slane %v1445, 4
    %v1467 = vrot.slane %v1445, 5
    %v1468 = vrot.slane %v1445, 6
    %v1469 = vrot.slane %v1445, 7
    %v1470 = vperm.slane %v1443, 0
    %v1471 = vperm.slane %v1449, 0
    %v1472 = vperm.slane %v1450, 0
    %v1473 = vperm.slane %v1451, 0
    %v1474 = vperm.slane %v1452, 0
    %v1475 = vperm.slane %v1453, 0
    %v1476 = vperm.slane %v1454, 0
    %v1477 = vperm.slane %v1455, 0
    %v1478 = vperm.slane %v1444, 0
    %v1479 = vperm.slane %v1456, 0
    %v1480 = vperm.slane %v1457, 0
    %v1481 = vperm.slane %v1458, 0
    %v1482 = vperm.slane %v1459, 0
    %v1483 = vperm.slane %v1460, 0
    %v1484 = vperm.slane %v1461, 0
    %v1485 = vperm.slane %v1462, 0
    %v1486 = vperm.slane %v1445, 0
    %v1487 = vperm.slane %v1463, 0
    %v1488 = vperm.slane %v1464, 0
    %v1489 = vperm.slane %v1465, 0
    %v1490 = vperm.slane %v1466, 0
    %v1491 = vperm.slane %v1467, 0
    %v1492 = vperm.slane %v1468, 0
    %v1493 = vperm.slane %v1469, 0
    %v1518 = vmul.f32 %v1470, %v792
    %v1519 = vmul.f32 %v1470, %v798
    %v1520 = vmul.f32 %v1471, %v805
    %v1521 = vmul.f32 %v1471, %v811
    %v1522 = vmul.f32 %v1472, %v818
    %v1523 = vmul.f32 %v1472, %v824
    %v1524 = vmul.f32 %v1473, %v831
    %v1525 = vmul.f32 %v1473, %v837
    %v1526 = vmul.f32 %v1474, %v844
    %v1527 = vmul.f32 %v1474, %v850
    %v1528 = vmul.f32 %v1475, %v857
    %v1529 = vmul.f32 %v1475, %v863
    %v1530 = vmul.f32 %v1476, %v870
    %v1531 = vmul.f32 %v1476, %v876
    %v1532 = vmul.f32 %v1477, %v883
    %v1533 = vmul.f32 %v1477, %v889
    %v1534 = vmul.f32 %v1478, %v896
    %v1535 = vmul.f32 %v1478, %v902
    %v1536 = vmul.f32 %v1479, %v909
    %v1537 = vmul.f32 %v1479, %v915
    %v1538 = vmul.f32 %v1480, %v922
    %v1539 = vmul.f32 %v1480, %v928
    %v1540 = vmul.f32 %v1481, %v935
    %v1541 = vmul.f32 %v1481, %v941
    %v1542 = vmul.f32 %v1482, %v948
    %v1543 = vmul.f32 %v1482, %v954
    %v1544 = vmul.f32 %v1483, %v961
    %v1545 = vmul.f32 %v1483, %v967
    %v1546 = vmul.f32 %v1484, %v974
    %v1547 = vmul.f32 %v1484, %v980
    %v1548 = vmul.f32 %v1485, %v987
    %v1549 = vmul.f32 %v1485, %v993
    %v1550 = vmul.f32 %v1486, %v1000
    %v1551 = vmul.f32 %v1486, %v1006
    %v1552 = vmul.f32 %v1487, %v1013
    %v1553 = vmul.f32 %v1487, %v1019
    %v1554 = vmul.f32 %v1488, %v1026
    %v1555 = vmul.f32 %v1488, %v1032
    %v1556 = vmul.f32 %v1489, %v1039
    %v1557 = vmul.f32 %v1489, %v1045
    %v1558 = vmul.f32 %v1490, %v1052
    %v1559 = vmul.f32 %v1490, %v1058
    %v1560 = vmul.f32 %v1491, %v1065
    %v1561 = vmul.f32 %v1491, %v1071
    %v1562 = vmul.f32 %v1492, %v1078
    %v1563 = vmul.f32 %v1492, %v1084
    %v1564 = vmul.f32 %v1493, %v1091
    %v1565 = vmul.f32 %v1493, %v1097
    %v1566 = vsel %vm141, %v1518, -inf
    %v1567 = vsel %vm141, %v1520, -inf
    %v1568 = vsel %vm141, %v1522, -inf
    %v1569 = vmax.f32 %v1566, %v1568
    %v1570 = vsel %vm141, %v1524, -inf
    %v1571 = vmax.f32 %v1567, %v1570
    %v1572 = vsel %vm141, %v1526, -inf
    %v1573 = vmax.f32 %v1569, %v1572
    %v1574 = vsel %vm141, %v1528, -inf
    %v1575 = vmax.f32 %v1571, %v1574
    %v1576 = vsel %vm141, %v1530, -inf
    %v1577 = vmax.f32 %v1573, %v1576
    %v1578 = vsel %vm141, %v1532, -inf
    %v1579 = vmax.f32 %v1575, %v1578
    %v1580 = vsel %vm141, %v1534, -inf
    %v1581 = vmax.f32 %v1577, %v1580
    %v1582 = vsel %vm141, %v1536, -inf
    %v1583 = vmax.f32 %v1579, %v1582
    %v1584 = vsel %vm141, %v1538, -inf
    %v1585 = vmax.f32 %v1581, %v1584
    %v1586 = vsel %vm141, %v1540, -inf
    %v1587 = vmax.f32 %v1583, %v1586
    %v1588 = vsel %vm141, %v1542, -inf
    %v1589 = vmax.f32 %v1585, %v1588
    %v1590 = vsel %vm141, %v1544, -inf
    %v1591 = vmax.f32 %v1587, %v1590
    %v1592 = vsel %vm141, %v1546, -inf
    %v1593 = vmax.f32 %v1589, %v1592
    %v1594 = vsel %vm141, %v1548, -inf
    %v1595 = vmax.f32 %v1591, %v1594
    %v1596 = vsel %vm141, %v1550, -inf
    %v1597 = vmax.f32 %v1593, %v1596
    %v1598 = vsel %vm141, %v1552, -inf
    %v1599 = vmax.f32 %v1595, %v1598
    %v1600 = vsel %vm141, %v1554, -inf
    %v1601 = vmax.f32 %v1597, %v1600
    %v1602 = vsel %vm141, %v1556, -inf
    %v1603 = vmax.f32 %v1599, %v1602
    %v1604 = vsel %vm141, %v1558, -inf
    %v1605 = vmax.f32 %v1601, %v1604
    %v1606 = vsel %vm141, %v1560, -inf
    %v1607 = vmax.f32 %v1603, %v1606
    %v1608 = vsel %vm141, %v1562, -inf
    %v1609 = vmax.f32 %v1605, %v1608
    %v1610 = vsel %vm141, %v1564, -inf
    %v1611 = vmax.f32 %v1607, %v1610
    %v1612 = vmax.f32 %v1609, %v1611
    %v1613 = vsel %vm141, %v1519, -inf
    %v1614 = vsel %vm141, %v1521, -inf
    %v1615 = vsel %vm141, %v1523, -inf
    %v1616 = vmax.f32 %v1613, %v1615
    %v1617 = vsel %vm141, %v1525, -inf
    %v1618 = vmax.f32 %v1614, %v1617
    %v1619 = vsel %vm141, %v1527, -inf
    %v1620 = vmax.f32 %v1616, %v1619
    %v1621 = vsel %vm141, %v1529, -inf
    %v1622 = vmax.f32 %v1618, %v1621
    %v1623 = vsel %vm141, %v1531, -inf
    %v1624 = vmax.f32 %v1620, %v1623
    %v1625 = vsel %vm141, %v1533, -inf
    %v1626 = vmax.f32 %v1622, %v1625
    %v1627 = vsel %vm141, %v1535, -inf
    %v1628 = vmax.f32 %v1624, %v1627
    %v1629 = vsel %vm141, %v1537, -inf
    %v1630 = vmax.f32 %v1626, %v1629
    %v1631 = vsel %vm141, %v1539, -inf
    %v1632 = vmax.f32 %v1628, %v1631
    %v1633 = vsel %vm141, %v1541, -inf
    %v1634 = vmax.f32 %v1630, %v1633
    %v1635 = vsel %vm141, %v1543, -inf
    %v1636 = vmax.f32 %v1632, %v1635
    %v1637 = vsel %vm141, %v1545, -inf
    %v1638 = vmax.f32 %v1634, %v1637
    %v1639 = vsel %vm141, %v1547, -inf
    %v1640 = vmax.f32 %v1636, %v1639
    %v1641 = vsel %vm141, %v1549, -inf
    %v1642 = vmax.f32 %v1638, %v1641
    %v1643 = vsel %vm141, %v1551, -inf
    %v1644 = vmax.f32 %v1640, %v1643
    %v1645 = vsel %vm141, %v1553, -inf
    %v1646 = vmax.f32 %v1642, %v1645
    %v1647 = vsel %vm141, %v1555, -inf
    %v1648 = vmax.f32 %v1644, %v1647
    %v1649 = vsel %vm141, %v1557, -inf
    %v1650 = vmax.f32 %v1646, %v1649
    %v1651 = vsel %vm141, %v1559, -inf
    %v1652 = vmax.f32 %v1648, %v1651
    %v1653 = vsel %vm141, %v1561, -inf
    %v1654 = vmax.f32 %v1650, %v1653
    %v1655 = vsel %vm141, %v1563, -inf
    %v1656 = vmax.f32 %v1652, %v1655
    %v1657 = vsel %vm141, %v1565, -inf
    %v1658 = vmax.f32 %v1654, %v1657
    %v1659 = vmax.f32 %v1656, %v1658
    %v1660 = vadd.f32 %v1612, 0.0
    %v1661 = vadd.f32 %v1659, 0.0
    %v1662 = vmax.f32 %v1660, 0.0
    %v1663 = vmax.f32 %v1661, 0.0
    %v1664 = vld [vmem:[%s16] sm:$0xff]
    %v1665 = vld [vmem:[%s16 + $0x8] sm:$0xff]
    %v1666 = vld [vmem:[%s16 + $0x10] sm:$0xff]
    %v1667 = vld [vmem:[%s16 + $0x18] sm:$0xff]
    %v1668 = vld [vmem:[%s17] sm:$0x1]
    %v1670 = vperm.slane %v1668, 0
    %v1673 = vsel %vm141, %v1662, 0
    %v1676 = vsel %vm141, %v1663, 0
    %1678 = vmatpush.msra.mxu0 0.0
    %1679 = vmatpush.msra.mxu0 0.0
    %1680 = vmatpush.msra.mxu0 0.0
    %1681 = vmatpush.msra.mxu0 0.0
    %1682 = vmatpush.msra.mxu0 0.0
    %1683 = vmatpush.msra.mxu0 0.0
    %1684 = vmatpush.msra.mxu0 0.0
    %1685 = vmatpush.msra.mxu0 0.0
    %1686 = vmatpush.msra.mxu0 0.0
    %1687 = vmatpush.msra.mxu0 0.0
    %1688 = vmatpush.msra.mxu0 0.0
    %1689 = vmatpush.msra.mxu0 0.0
    %1690 = vmatpush.msra.mxu0 %v1667
    %1691 = vmatpush.msra.mxu0 %v1666
    %1692 = vmatpush.msra.mxu0 %v1665
    %1693 = vmatpush.msra.mxu0 %v1664
    %1694 = vmatmul.f32.gmra.mxu0 %v1673
    %v1695 = vpop.f32.mrf.mxu0
    %v1696 = vadd.f32 %v1670, %v1695
    %1697 = vmatmul.f32.gmra.mxu0 %v1676
    %v1698 = vpop.f32.mrf.mxu0
    %v1699 = vadd.f32 %v1670, %v1698
    %1700 = vdwg.mxu0
    %vm1701 = vcmask 23552
    %1702 = vst.msk [vmem:[%s18] sm:$0xff] %vm1701, %v1696
    %1703 = vst.msk [vmem:[%s18 + $0x8] sm:$0xff] %vm1701, %v1699
    %v1704 = vsel %vm1701, %v1696, -inf
    %1705 = vmax.xlane.f32.xlu0 %v1704
    %v1706 = vpop.xlane.xlu0 %1705
    %v1707 = vsel %vm1701, %v1699, -inf
    %1708 = vmax.xlane.f32.xlu0 %v1707
    %v1709 = vpop.xlane.xlu0 %1708
    %v1710 = vsub.f32 %v1696, %v1706
    %v1711 = vsub.f32 %v1699, %v1709
    %v1712 = vmul.f32 %v1710, 1.442695
    %v1713 = vpow.pop %v1712
    %v1714 = vmul.f32 %v1711, 1.442695
    %v1715 = vpow.pop %v1714
    %v1716 = vsel %vm1701, %v1713, 0.0
    %1717 = vadd.xlane.f32.xlu0 %v1716
    %v1718 = vpop.xlane.xlu0 %1717
    %v1719 = vsel %vm1701, %v1715, 0.0
    %1720 = vadd.xlane.f32.xlu0 %v1719
    %v1721 = vpop.xlane.xlu0 %1720
    %v1722 = vrcp.pop %v1718
    %v1723 = vmul.f32 %v1718, %v1722
    %v1724 = vsub.f32 1.0, %v1723
    %v1725 = vmul.f32 %v1722, %v1724
    %v1726 = vadd.f32 %v1722, %v1725
    %vm1727 = vweird.f32 %v1718
    %vm1728 = vweird.f32 %v1722
    %vm1729 = vmor %vm1727, %vm1728
    %v1730 = vsel %vm1729, %v1722, %v1726
    %v1731 = vand.u32 2147483647, %v1718
    %vm1732 = vcmp.eq.f32.partialorder %v1731, 8.507059e+37
    %v1733 = vand.u32 %v1718, 2147483648
    %v1734 = vor.u32 1.1754944e-38, %v1733
    %v1735 = vsel %vm1732, %v1734, %v1730
    %v1736 = vmul.f32 %v1713, %v1735
    %v1737 = vrcp.pop %v1721
    %v1738 = vmul.f32 %v1721, %v1737
    %v1739 = vsub.f32 1.0, %v1738
    %v1740 = vmul.f32 %v1737, %v1739
    %v1741 = vadd.f32 %v1737, %v1740
    %vm1742 = vweird.f32 %v1721
    %vm1743 = vweird.f32 %v1737
    %vm1744 = vmor %vm1742, %vm1743
    %v1745 = vsel %vm1744, %v1737, %v1741
    %v1746 = vand.u32 2147483647, %v1721
    %vm1747 = vcmp.eq.f32.partialorder %v1746, 8.507059e+37
    %v1748 = vand.u32 %v1721, 2147483648
    %v1749 = vor.u32 1.1754944e-38, %v1748
    %v1750 = vsel %vm1747, %v1749, %v1745
    %v1751 = vmul.f32 %v1715, %v1750
    %1752 = vst.msk [vmem:[%s19] sm:$0xff] %vm1701, %v1736
    %1753 = vst.msk [vmem:[%s19 + $0x8] sm:$0xff] %vm1701, %v1751
    // Predicated region
    $region82: #{tpu_custom_call.1} parent=1 // pred_check
      _
    $region83: #{tpu_custom_call.1} parent=1 // pred_check_branch
      %1755 = sbr.rel (0) target = $region85
    $region84: #{tpu_custom_call.1} parent=1 // pred_region
      _
    $region85: #{tpu_custom_call.1} parent=1 // pred_fallthru
      _
    // Predicated region
    $region86: #{tpu_custom_call.1} parent=1 // pred_check
      _
    $region87: #{tpu_custom_call.1} parent=1 // pred_check_branch
      %1757 = sbr.rel (0) target = $region89
    $region88: #{tpu_custom_call.1} parent=1 // pred_region
      _
    $region89: #{tpu_custom_call.1} parent=1 // pred_fallthru
      _
    // Predicated region
    $region90: #{tpu_custom_call.1} parent=1 // pred_check
      _
    $region91: #{tpu_custom_call.1} parent=1 // pred_check_branch
      %1759 = sbr.rel (0) target = $region93
    $region92: #{tpu_custom_call.1} parent=1 // pred_region
      _
    $region93: #{tpu_custom_call.1} parent=1 // pred_fallthru
      _
    // Predicated region
    $region94: #{tpu_custom_call.1} parent=1 // pred_check
      _
    $region95: #{tpu_custom_call.1} parent=1 // pred_check_branch
      %1761 = sbr.rel (0) target = $region97
    $region96: #{tpu_custom_call.1} parent=1 // pred_region
      _
    $region97: #{tpu_custom_call.1} parent=1 // pred_fallthru
      _
    %1762 = vsyncpa [#allocation3], 1
    %1763 = vsyncpa [#allocation5], 1

</llo_original>
